<compile_context>
chip_gen: v6e
topology: v6e:2x2x1
jax: 0.10.0
libtpu: 0.0.40
codegen_flags: <defaults>
</compile_context>

<pallas_src>
import functools

import jax
import jax.numpy as jnp
from jax.experimental import pallas as pl
from jax.experimental.pallas import tpu as pltpu

EPS = 1e-5


# ------------------------------ Pallas kernel ------------------------------ #

def _downsampling_block_kernel(xee_ref, xeo_ref, xoe_ref, xoo_ref,
                               w1c_ref, w2c_ref, shift_ref,
                               o_ref, y1p_ref, *, Ho, Wo):
    """Fused DownSamplingBlock for B_tile images (one grid step).

    Inputs:
      x??_ref : (B, HPH, WPH, Cin) — even/odd row/col phases of the padded
                input (ee, eo, oe, oo), already in the MXU compute dtype.
                Phase split replaces im2col: every stride-2 tap of the 3x3
                conv is a contiguous slice of one phase.
      w1c_ref : (9*Cin, 2*Cout)  conv1 weights (bn1 scale folded, tap-major
                rows) with the shortcut 1x1 weights (bns scale folded) as the
                trailing Cout columns, nonzero only on the center-tap rows.
      w2c_ref : (9*Cout, Cout)   conv2 weights with bn2 scale folded in.
      shift_ref: (3, Cout) f32   rows = [shift1, shift2, shift_shortcut].
      o_ref   : (B, Ho*Wo, Cout) output block.
      y1p_ref : (B, Ho+2, Wo+2, Cout) VMEM scratch (zero-padded y1, compute dtype).
    """
    B = o_ref.shape[0]
    Cout = o_ref.shape[-1]
    Cin = xee_ref.shape[-1]
    M = B * Ho * Wo
    cdt = w1c_ref.dtype                       # MXU operand dtype (bf16 or f32)
    phases = {(0, 0): xee_ref, (0, 1): xeo_ref,
              (1, 0): xoe_ref, (1, 1): xoo_ref}

    # ---- conv1 (+ folded shortcut): one deep-K MXU dot, K = 9*Cin ----------
    taps = []
    for kh in range(3):
        for kw in range(3):
            src = phases[(kh % 2, kw % 2)]
            t = src[:, kh // 2:kh // 2 + Ho, kw // 2:kw // 2 + Wo, :]
            taps.append(t.reshape(M, Cin))
    patches1 = jnp.concatenate(taps, axis=-1)                   # (M, 9*Cin)
    acc = jnp.dot(patches1, w1c_ref[...],
                  preferred_element_type=jnp.float32)           # (M, 2*Cout) f32
    y1 = jnp.maximum(acc[:, :Cout] + shift_ref[0:1, :], 0.0)    # bn1 + relu
    shortcut = acc[:, Cout:] + shift_ref[2:3, :]                # bns (no relu)

    # ---- stage y1 in the zero-padded VMEM scratch (border-only re-zero) ----
    zr = jnp.zeros((B, 1, Wo + 2, Cout), cdt)
    zc = jnp.zeros((B, Ho + 2, 1, Cout), cdt)
    y1p_ref[:, 0:1, :, :] = zr
    y1p_ref[:, Ho + 1:Ho + 2, :, :] = zr
    y1p_ref[:, :, 0:1, :] = zc
    y1p_ref[:, :, Wo + 1:Wo + 2, :] = zc
    y1p_ref[:, 1:Ho + 1, 1:Wo + 1, :] = y1.reshape(B, Ho, Wo, Cout).astype(cdt)

    # ---- conv2: one deep-K MXU dot, K = 9*Cout ------------------------------
    wins = []
    for kh in range(3):
        for kw in range(3):
            win = y1p_ref[:, kh:kh + Ho, kw:kw + Wo, :]
            wins.append(win.reshape(M, Cout))
    patches2 = jnp.concatenate(wins, axis=-1)                   # (M, 9*Cout)
    acc2 = jnp.dot(patches2, w2c_ref[...],
                   preferred_element_type=jnp.float32)          # (M, Cout) f32
    y2 = jnp.maximum(acc2 + shift_ref[1:2, :], 0.0)             # bn2 + relu

    # ---- residual add + final relu ------------------------------------------
    out = jnp.maximum(y2 + shortcut, 0.0)
    o_ref[...] = out.reshape(B, Ho * Wo, Cout).astype(o_ref.dtype)


# ------------------------------- host glue --------------------------------- #

def _pick_vmem_limit():
    """~3/4 of physical VMEM: ~48 MiB on v7x, ~96 MiB on v5e/v6e."""
    try:
        cap = int(pltpu.get_tpu_info().vmem_capacity_bytes)
    except Exception:
        cap = 64 * 1024 * 1024
    return min(cap * 3 // 4, 112 * 1024 * 1024)


def _pick_batch_tile(N, Ho, Wo, Cin, Cout, in_item, cdt_item, vmem_limit):
    """Largest divisor of N whose per-step VMEM estimate fits the budget."""
    HPH, WPH = Ho + 1, Wo + 1
    per_img = (
        2 * 4 * HPH * WPH * Cin * in_item            # 4 phases, double-buffered
        + 2 * Ho * Wo * Cout * 4                      # output block, double-buffered
        + (Ho + 2) * (Wo + 2) * Cout * cdt_item       # y1p scratch
        + Ho * Wo * (9 * Cin + 9 * Cout) * cdt_item   # in-VMEM im2col temporaries
        + Ho * Wo * 3 * Cout * 4                      # f32 accumulators / epilogue
    )
    budget = max(vmem_limit // 2, per_img)            # headroom: weights, pipelining
    max_bt_for_m = max(1, 4096 // max(Ho * Wo, 1))    # enough M per step already
    bt = max(1, min(N, budget // per_img, max_bt_for_m))
    while N % bt:
        bt -= 1
    return bt


def downsampling_block_forward(x_nchw, p, *, compute_dtype=jnp.bfloat16):
    """Forward of DownSamplingBlock(in_ch, out_ch, downsample=True) (NCHW)."""
    x = jnp.transpose(x_nchw, (0, 2, 3, 1)).astype(jnp.float32)   # NHWC
    N, H, W, Cin = x.shape
    Cout = p["w1"].shape[0]
    assert H % 2 == 0 and W % 2 == 0, "even spatial dims expected"
    Ho, Wo = H // 2, W // 2

    # Zero-pad (pad=1) and split into even/odd row/col phases (pure re-layout,
    # zero data expansion — this replaces the 9x im2col), cast to bf16 for the
    # MXU so HBM DMA bytes are halved.
    xp = jnp.pad(x, ((0, 0), (1, 1), (1, 1), (0, 0))).astype(compute_dtype)
    HPH, WPH = (H + 2) // 2, (W + 2) // 2
    phases = [xp[:, ph::2, pw::2, :] for ph in (0, 1) for pw in (0, 1)]

    # Fold conv bias + inference BatchNorm into per-channel (scale, shift);
    # fold the scale into the weight columns so the kernel epilogue is add-only.
    def fold(gamma, beta, mean, var, bias):
        s = gamma / jnp.sqrt(var + EPS)
        return s, beta - mean * s + bias * s

    s1, sh1 = fold(p["bn1_g"], p["bn1_b"], p["bn1_m"], p["bn1_v"], p["b1"])
    s2, sh2 = fold(p["bn2_g"], p["bn2_b"], p["bn2_m"], p["bn2_v"], p["b2"])
    ss, shs = fold(p["bns_g"], p["bns_b"], p["bns_m"], p["bns_v"], p["bs"])

    # conv1 weights, tap-major rows (kh, kw, cin), bn1 scale folded in.
    w1f = (jnp.transpose(p["w1"], (2, 3, 1, 0)) * s1).reshape(9 * Cin, Cout)
    # Shortcut 1x1 weights (bns scale folded) appended as extra output columns,
    # nonzero only on the center-tap (kh=1, kw=1 -> tap 4) rows.
    ws_t = jnp.transpose(p["ws"][:, :, 0, 0], (1, 0)) * ss          # (Cin, Cout)
    ws_exp = jnp.zeros((9 * Cin, Cout), jnp.float32).at[4 * Cin:5 * Cin, :].set(ws_t)
    w1c = jnp.concatenate([w1f, ws_exp], axis=1).astype(compute_dtype)   # (9*Cin, 2*Cout)
    w2c = (jnp.transpose(p["w2"], (2, 3, 1, 0)) * s2
           ).reshape(9 * Cout, Cout).astype(compute_dtype)               # (9*Cout, Cout)
    shifts = jnp.stack([sh1, sh2, shs], axis=0).astype(jnp.float32)      # (3, Cout)

    in_item = jnp.dtype(compute_dtype).itemsize
    vmem_limit = _pick_vmem_limit()
    B_tile = _pick_batch_tile(N, Ho, Wo, Cin, Cout, in_item, in_item, vmem_limit)
    grid = (N // B_tile,)

    phase_spec = pl.BlockSpec((B_tile, HPH, WPH, Cin), lambda n: (n, 0, 0, 0))
    # Weights / shifts: constant index_maps -> fetched once, resident across grid.
    # (pl.Buffered(1) would halve their resident footprint; left at default.)
    w1c_spec = pl.BlockSpec((9 * Cin, 2 * Cout), lambda n: (0, 0))
    w2c_spec = pl.BlockSpec((9 * Cout, Cout), lambda n: (0, 0))
    shift_spec = pl.BlockSpec((3, Cout), lambda n: (0, 0))

    flops = 2 * N * Ho * Wo * (9 * Cin * 2 * Cout + 9 * Cout * Cout)
    bytes_accessed = (4 * N * HPH * WPH * Cin * in_item
                      + (w1c.size + w2c.size) * in_item + shifts.size * 4
                      + N * Ho * Wo * Cout * 4)

    out = pl.pallas_call(
        functools.partial(_downsampling_block_kernel, Ho=Ho, Wo=Wo),
        grid_spec=pltpu.PrefetchScalarGridSpec(
            num_scalar_prefetch=0,
            grid=grid,                                       # pipelined over batch tiles
            in_specs=[phase_spec, phase_spec, phase_spec, phase_spec,
                      w1c_spec, w2c_spec, shift_spec],
            out_specs=pl.BlockSpec((B_tile, Ho * Wo, Cout), lambda n: (n, 0, 0)),
            scratch_shapes=[pltpu.VMEM((B_tile, Ho + 2, Wo + 2, Cout), compute_dtype)]),
        out_shape=jax.ShapeDtypeStruct((N, Ho * Wo, Cout), jnp.float32),
        compiler_params=pltpu.CompilerParams(
            dimension_semantics=("parallel",),               # megacore sharding on v7x
            vmem_limit_bytes=int(vmem_limit)),
        cost_estimate=pl.CostEstimate(flops=int(flops), transcendentals=0,
                                      bytes_accessed=int(bytes_accessed)),
    )(phases[0], phases[1], phases[2], phases[3], w1c, w2c, shifts)

    return jnp.transpose(out.reshape(N, Ho, Wo, Cout), (0, 3, 1, 2))   # NCHW


# --------------------------- pure-JAX reference ----------------------------- #

def reference_forward(x_nchw, p, eps=EPS):
    x = jnp.transpose(x_nchw, (0, 2, 3, 1)).astype(jnp.float32)

    def conv(xx, w, b, stride, pad):
        w_hwio = jnp.transpose(w, (2, 3, 1, 0))
        y = jax.lax.conv_general_dilated(
            xx, w_hwio, (stride, stride), [(pad, pad), (pad, pad)],
            dimension_numbers=("NHWC", "HWIO", "NHWC"))
        return y + b

    def bn(xx, g, b, m, v):
        return (xx - m) / jnp.sqrt(v + eps) * g + b

    sc = bn(conv(x, p["ws"], p["bs"], 2, 0),
            p["bns_g"], p["bns_b"], p["bns_m"], p["bns_v"])
    y = jax.nn.relu(bn(conv(x, p["w1"], p["b1"], 2, 1),
                       p["bn1_g"], p["bn1_b"], p["bn1_m"], p["bn1_v"]))
    y = jax.nn.relu(bn(conv(y, p["w2"], p["b2"], 1, 1),
                       p["bn2_g"], p["bn2_b"], p["bn2_m"], p["bn2_v"]))
    out = jax.nn.relu(y + sc)
    return jnp.transpose(out, (0, 3, 1, 2))


# ---------------------------- parameter init -------------------------------- #

def init_params(key, in_channels, out_channels):
    ks = jax.random.split(key, 6)

    def kaiming_fan_out(k, shape):          # shape = (Cout, Cin, kh, kw)
        fan_out = shape[0] * shape[2] * shape[3]
        return jax.random.normal(k, shape, jnp.float32) * jnp.sqrt(2.0 / fan_out)

    def conv_bias(k, shape):                # PyTorch default conv bias init
        fan_in = shape[1] * shape[2] * shape[3]
        bound = 1.0 / jnp.sqrt(fan_in)
        return jax.random.uniform(k, (shape[0],), jnp.float32, -bound, bound)

    def bn_params(c):
        return dict(g=jnp.ones((c,), jnp.float32), b=jnp.zeros((c,), jnp.float32),
                    m=jnp.zeros((c,), jnp.float32), v=jnp.ones((c,), jnp.float32))

    w1_shape = (out_channels, in_channels, 3, 3)
    w2_shape = (out_channels, out_channels, 3, 3)
    ws_shape = (out_channels, in_channels, 1, 1)
    bn1, bn2, bns = bn_params(out_channels), bn_params(out_channels), bn_params(out_channels)
    return {
        "w1": kaiming_fan_out(ks[0], w1_shape), "b1": conv_bias(ks[1], w1_shape),
        "w2": kaiming_fan_out(ks[2], w2_shape), "b2": conv_bias(ks[3], w2_shape),
        "ws": kaiming_fan_out(ks[4], ws_shape), "bs": conv_bias(ks[5], ws_shape),
        "bn1_g": bn1["g"], "bn1_b": bn1["b"], "bn1_m": bn1["m"], "bn1_v": bn1["v"],
        "bn2_g": bn2["g"], "bn2_b": bn2["b"], "bn2_m": bn2["m"], "bn2_v": bn2["v"],
        "bns_g": bns["g"], "bns_b": bns["b"], "bns_m": bns["m"], "bns_v": bns["v"],
    }


# ----------------------------------- main ----------------------------------- #

if __name__ == "__main__":
    key = jax.random.PRNGKey(0)
    k_param, k_x = jax.random.split(key)

    N, Cin, H, W = 2, 4, 16, 16
    Cout = 8
    params = init_params(k_param, Cin, Cout)
    x = jax.random.normal(k_x, (N, Cin, H, W), jnp.float32)

    ref = jax.block_until_ready(reference_forward(x, params))

    # f32 MXU path: exact check against the pure-JAX reference.
    out = jax.block_until_ready(
        downsampling_block_forward(x, params, compute_dtype=jnp.float32))
    assert out.shape == (N, Cout, H // 2, W // 2), out.shape
    assert jnp.allclose(out, ref, atol=1e-4, rtol=1e-4), \
        float(jnp.max(jnp.abs(out - ref)))

    # bf16 MXU path (default; recommended on v5e/v6e/v7x): f32 accumulation and
    # f32 epilogue, so only MXU-input / y1-staging rounding differs.
    out_bf16 = jax.block_until_ready(
        downsampling_block_forward(x, params, compute_dtype=jnp.bfloat16))
    err = float(jnp.max(jnp.abs(out_bf16 - ref)))
    assert err < 0.25, err

    print("KERNEL_OK")
</pallas_src>

<mosaic_0001>
module attributes {stable_mosaic.version = 11 : i64} {
  func.func @_downsampling_block_kernel(%arg0: i32, %arg1: memref<2x9x9x4xf32, #tpu.memory_space<vmem>>, %arg2: memref<2x9x9x4xf32, #tpu.memory_space<vmem>>, %arg3: memref<2x9x9x4xf32, #tpu.memory_space<vmem>>, %arg4: memref<2x9x9x4xf32, #tpu.memory_space<vmem>>, %arg5: memref<36x16xf32, #tpu.memory_space<vmem>>, %arg6: memref<72x8xf32, #tpu.memory_space<vmem>>, %arg7: memref<3x8xf32, #tpu.memory_space<vmem>>, %arg8: memref<2x64x8xf32, #tpu.memory_space<vmem>>, %arg9: memref<2x10x10x8xf32, #tpu.memory_space<vmem>>) attributes {dimension_semantics = [#tpu.dimension_semantics<parallel>], iteration_bounds = array<i64: 1>, scalar_prefetch = 0 : i64, scratch_operands = 1 : i64, tpu.core_type = #tpu.core_type<tc>, window_params = [{transform_indices = @transform_0, window_bounds = array<i64: 2, 9, 9, 4>}, {transform_indices = @transform_1, window_bounds = array<i64: 2, 9, 9, 4>}, {transform_indices = @transform_2, window_bounds = array<i64: 2, 9, 9, 4>}, {transform_indices = @transform_3, window_bounds = array<i64: 2, 9, 9, 4>}, {pipeline_mode = #tpu.pipeline_mode<synchronous>, transform_indices = @transform_4, window_bounds = array<i64: 36, 16>}, {pipeline_mode = #tpu.pipeline_mode<synchronous>, transform_indices = @transform_5, window_bounds = array<i64: 72, 8>}, {pipeline_mode = #tpu.pipeline_mode<synchronous>, transform_indices = @transform_6, window_bounds = array<i64: 3, 8>}, {transform_indices = @transform_7, window_bounds = array<i64: 2, 64, 8>}]} {
    %c0 = arith.constant 0 : index
    %c0_0 = arith.constant 0 : index
    %c0_1 = arith.constant 0 : index
    %c0_2 = arith.constant 0 : index
    %0 = vector.load %arg1[%c0, %c0_0, %c0_1, %c0_2] : memref<2x9x9x4xf32, #tpu.memory_space<vmem>>, vector<2x8x8x4xf32>
    %1 = vector.shape_cast %0 : vector<2x8x8x4xf32> to vector<128x4xf32>
    %c0_3 = arith.constant 0 : index
    %c0_4 = arith.constant 0 : index
    %c0_5 = arith.constant 0 : index
    %c0_6 = arith.constant 0 : index
    %2 = vector.load %arg2[%c0_3, %c0_4, %c0_5, %c0_6] : memref<2x9x9x4xf32, #tpu.memory_space<vmem>>, vector<2x8x8x4xf32>
    %3 = vector.shape_cast %2 : vector<2x8x8x4xf32> to vector<128x4xf32>
    %c0_7 = arith.constant 0 : index
    %c0_8 = arith.constant 0 : index
    %c1 = arith.constant 1 : index
    %c0_9 = arith.constant 0 : index
    %4 = vector.load %arg1[%c0_7, %c0_8, %c1, %c0_9] : memref<2x9x9x4xf32, #tpu.memory_space<vmem>>, vector<2x8x8x4xf32>
    %5 = vector.shape_cast %4 : vector<2x8x8x4xf32> to vector<128x4xf32>
    %c0_10 = arith.constant 0 : index
    %c0_11 = arith.constant 0 : index
    %c0_12 = arith.constant 0 : index
    %c0_13 = arith.constant 0 : index
    %6 = vector.load %arg3[%c0_10, %c0_11, %c0_12, %c0_13] : memref<2x9x9x4xf32, #tpu.memory_space<vmem>>, vector<2x8x8x4xf32>
    %7 = vector.shape_cast %6 : vector<2x8x8x4xf32> to vector<128x4xf32>
    %c0_14 = arith.constant 0 : index
    %c0_15 = arith.constant 0 : index
    %c0_16 = arith.constant 0 : index
    %c0_17 = arith.constant 0 : index
    %8 = vector.load %arg4[%c0_14, %c0_15, %c0_16, %c0_17] : memref<2x9x9x4xf32, #tpu.memory_space<vmem>>, vector<2x8x8x4xf32>
    %9 = vector.shape_cast %8 : vector<2x8x8x4xf32> to vector<128x4xf32>
    %c0_18 = arith.constant 0 : index
    %c0_19 = arith.constant 0 : index
    %c1_20 = arith.constant 1 : index
    %c0_21 = arith.constant 0 : index
    %10 = vector.load %arg3[%c0_18, %c0_19, %c1_20, %c0_21] : memref<2x9x9x4xf32, #tpu.memory_space<vmem>>, vector<2x8x8x4xf32>
    %11 = vector.shape_cast %10 : vector<2x8x8x4xf32> to vector<128x4xf32>
    %c0_22 = arith.constant 0 : index
    %c1_23 = arith.constant 1 : index
    %c0_24 = arith.constant 0 : index
    %c0_25 = arith.constant 0 : index
    %12 = vector.load %arg1[%c0_22, %c1_23, %c0_24, %c0_25] : memref<2x9x9x4xf32, #tpu.memory_space<vmem>>, vector<2x8x8x4xf32>
    %13 = vector.shape_cast %12 : vector<2x8x8x4xf32> to vector<128x4xf32>
    %c0_26 = arith.constant 0 : index
    %c1_27 = arith.constant 1 : index
    %c0_28 = arith.constant 0 : index
    %c0_29 = arith.constant 0 : index
    %14 = vector.load %arg2[%c0_26, %c1_27, %c0_28, %c0_29] : memref<2x9x9x4xf32, #tpu.memory_space<vmem>>, vector<2x8x8x4xf32>
    %15 = vector.shape_cast %14 : vector<2x8x8x4xf32> to vector<128x4xf32>
    %c0_30 = arith.constant 0 : index
    %c1_31 = arith.constant 1 : index
    %c1_32 = arith.constant 1 : index
    %c0_33 = arith.constant 0 : index
    %16 = vector.load %arg1[%c0_30, %c1_31, %c1_32, %c0_33] : memref<2x9x9x4xf32, #tpu.memory_space<vmem>>, vector<2x8x8x4xf32>
    %17 = vector.shape_cast %16 : vector<2x8x8x4xf32> to vector<128x4xf32>
    %18 = tpu.concatenate %1, %3, %5, %7, %9, %11, %13, %15, %17 in 1 : vector<128x4xf32>, vector<128x4xf32>, vector<128x4xf32>, vector<128x4xf32>, vector<128x4xf32>, vector<128x4xf32>, vector<128x4xf32>, vector<128x4xf32>, vector<128x4xf32> -> vector<128x36xf32>
    %c0_34 = arith.constant 0 : index
    %c0_35 = arith.constant 0 : index
    %19 = vector.load %arg5[%c0_34, %c0_35] : memref<36x16xf32, #tpu.memory_space<vmem>>, vector<36x16xf32>
    %cst = arith.constant dense<0.000000e+00> : vector<128x16xf32>
    %20 = tpu.matmul %18, %19, %cst {dimension_numbers = #tpu.dot_dimension_numbers<[1], [0], [0], [1], [0, 0, 1, 1], [], []>} : vector<128x36xf32>, vector<36x16xf32>, vector<128x16xf32> -> vector<128x16xf32>
    %21 = vector.extract_strided_slice %20 {offsets = [0, 0], sizes = [128, 8], strides = [1, 1]} : vector<128x16xf32> to vector<128x8xf32>
    %c0_36 = arith.constant 0 : index
    %c0_37 = arith.constant 0 : index
    %22 = vector.load %arg7[%c0_36, %c0_37] : memref<3x8xf32, #tpu.memory_space<vmem>>, vector<1x8xf32>
    %23 = vector.broadcast %22 : vector<1x8xf32> to vector<128x8xf32>
    %24 = arith.addf %21, %23 : vector<128x8xf32>
    %cst_38 = arith.constant 0.000000e+00 : f32
    %25 = vector.broadcast %cst_38 : f32 to vector<128x8xf32>
    %26 = arith.maximumf %24, %25 : vector<128x8xf32>
    %27 = vector.extract_strided_slice %20 {offsets = [0, 8], sizes = [128, 8], strides = [1, 1]} : vector<128x16xf32> to vector<128x8xf32>
    %c2 = arith.constant 2 : index
    %c0_39 = arith.constant 0 : index
    %28 = vector.load %arg7[%c2, %c0_39] : memref<3x8xf32, #tpu.memory_space<vmem>>, vector<1x8xf32>
    %29 = vector.broadcast %28 : vector<1x8xf32> to vector<128x8xf32>
    %30 = arith.addf %27, %29 : vector<128x8xf32>
    %cst_40 = arith.constant 0.000000e+00 : f32
    %31 = vector.broadcast %cst_40 : f32 to vector<2x1x10x8xf32>
    %cst_41 = arith.constant 0.000000e+00 : f32
    %32 = vector.broadcast %cst_41 : f32 to vector<2x10x1x8xf32>
    %c0_42 = arith.constant 0 : index
    %c0_43 = arith.constant 0 : index
    %c0_44 = arith.constant 0 : index
    %c0_45 = arith.constant 0 : index
    %33 = vector.load %arg9[%c0_42, %c0_43, %c0_44, %c0_45] : memref<2x10x10x8xf32, #tpu.memory_space<vmem>>, vector<2x1x10x8xf32>
    tpu.vector_store %arg9[%c0_42, %c0_43, %c0_44, %c0_45], %31 {strides = array<i32>} : memref<2x10x10x8xf32, #tpu.memory_space<vmem>>, vector<2x1x10x8xf32>,
    %c0_46 = arith.constant 0 : index
    %c9 = arith.constant 9 : index
    %c0_47 = arith.constant 0 : index
    %c0_48 = arith.constant 0 : index
    %34 = vector.load %arg9[%c0_46, %c9, %c0_47, %c0_48] : memref<2x10x10x8xf32, #tpu.memory_space<vmem>>, vector<2x1x10x8xf32>
    tpu.vector_store %arg9[%c0_46, %c9, %c0_47, %c0_48], %31 {strides = array<i32>} : memref<2x10x10x8xf32, #tpu.memory_space<vmem>>, vector<2x1x10x8xf32>,
    %c0_49 = arith.constant 0 : index
    %c0_50 = arith.constant 0 : index
    %c0_51 = arith.constant 0 : index
    %c0_52 = arith.constant 0 : index
    %35 = vector.load %arg9[%c0_49, %c0_50, %c0_51, %c0_52] : memref<2x10x10x8xf32, #tpu.memory_space<vmem>>, vector<2x10x1x8xf32>
    tpu.vector_store %arg9[%c0_49, %c0_50, %c0_51, %c0_52], %32 {strides = array<i32>} : memref<2x10x10x8xf32, #tpu.memory_space<vmem>>, vector<2x10x1x8xf32>,
    %c0_53 = arith.constant 0 : index
    %c0_54 = arith.constant 0 : index
    %c9_55 = arith.constant 9 : index
    %c0_56 = arith.constant 0 : index
    %36 = vector.load %arg9[%c0_53, %c0_54, %c9_55, %c0_56] : memref<2x10x10x8xf32, #tpu.memory_space<vmem>>, vector<2x10x1x8xf32>
    tpu.vector_store %arg9[%c0_53, %c0_54, %c9_55, %c0_56], %32 {strides = array<i32>} : memref<2x10x10x8xf32, #tpu.memory_space<vmem>>, vector<2x10x1x8xf32>,
    %37 = vector.shape_cast %26 : vector<128x8xf32> to vector<2x8x8x8xf32>
    %c0_57 = arith.constant 0 : index
    %c1_58 = arith.constant 1 : index
    %c1_59 = arith.constant 1 : index
    %c0_60 = arith.constant 0 : index
    %38 = vector.load %arg9[%c0_57, %c1_58, %c1_59, %c0_60] : memref<2x10x10x8xf32, #tpu.memory_space<vmem>>, vector<2x8x8x8xf32>
    tpu.vector_store %arg9[%c0_57, %c1_58, %c1_59, %c0_60], %37 {strides = array<i32>} : memref<2x10x10x8xf32, #tpu.memory_space<vmem>>, vector<2x8x8x8xf32>,
    %c0_61 = arith.constant 0 : index
    %c0_62 = arith.constant 0 : index
    %c0_63 = arith.constant 0 : index
    %c0_64 = arith.constant 0 : index
    %39 = vector.load %arg9[%c0_61, %c0_62, %c0_63, %c0_64] : memref<2x10x10x8xf32, #tpu.memory_space<vmem>>, vector<2x8x8x8xf32>
    %40 = vector.shape_cast %39 : vector<2x8x8x8xf32> to vector<128x8xf32>
    %c0_65 = arith.constant 0 : index
    %c0_66 = arith.constant 0 : index
    %c1_67 = arith.constant 1 : index
    %c0_68 = arith.constant 0 : index
    %41 = vector.load %arg9[%c0_65, %c0_66, %c1_67, %c0_68] : memref<2x10x10x8xf32, #tpu.memory_space<vmem>>, vector<2x8x8x8xf32>
    %42 = vector.shape_cast %41 : vector<2x8x8x8xf32> to vector<128x8xf32>
    %c0_69 = arith.constant 0 : index
    %c0_70 = arith.constant 0 : index
    %c2_71 = arith.constant 2 : index
    %c0_72 = arith.constant 0 : index
    %43 = vector.load %arg9[%c0_69, %c0_70, %c2_71, %c0_72] : memref<2x10x10x8xf32, #tpu.memory_space<vmem>>, vector<2x8x8x8xf32>
    %44 = vector.shape_cast %43 : vector<2x8x8x8xf32> to vector<128x8xf32>
    %c0_73 = arith.constant 0 : index
    %c1_74 = arith.constant 1 : index
    %c0_75 = arith.constant 0 : index
    %c0_76 = arith.constant 0 : index
    %45 = vector.load %arg9[%c0_73, %c1_74, %c0_75, %c0_76] : memref<2x10x10x8xf32, #tpu.memory_space<vmem>>, vector<2x8x8x8xf32>
    %46 = vector.shape_cast %45 : vector<2x8x8x8xf32> to vector<128x8xf32>
    %c0_77 = arith.constant 0 : index
    %c1_78 = arith.constant 1 : index
    %c1_79 = arith.constant 1 : index
    %c0_80 = arith.constant 0 : index
    %47 = vector.load %arg9[%c0_77, %c1_78, %c1_79, %c0_80] : memref<2x10x10x8xf32, #tpu.memory_space<vmem>>, vector<2x8x8x8xf32>
    %48 = vector.shape_cast %47 : vector<2x8x8x8xf32> to vector<128x8xf32>
    %c0_81 = arith.constant 0 : index
    %c1_82 = arith.constant 1 : index
    %c2_83 = arith.constant 2 : index
    %c0_84 = arith.constant 0 : index
    %49 = vector.load %arg9[%c0_81, %c1_82, %c2_83, %c0_84] : memref<2x10x10x8xf32, #tpu.memory_space<vmem>>, vector<2x8x8x8xf32>
    %50 = vector.shape_cast %49 : vector<2x8x8x8xf32> to vector<128x8xf32>
    %c0_85 = arith.constant 0 : index
    %c2_86 = arith.constant 2 : index
    %c0_87 = arith.constant 0 : index
    %c0_88 = arith.constant 0 : index
    %51 = vector.load %arg9[%c0_85, %c2_86, %c0_87, %c0_88] : memref<2x10x10x8xf32, #tpu.memory_space<vmem>>, vector<2x8x8x8xf32>
    %52 = vector.shape_cast %51 : vector<2x8x8x8xf32> to vector<128x8xf32>
    %c0_89 = arith.constant 0 : index
    %c2_90 = arith.constant 2 : index
    %c1_91 = arith.constant 1 : index
    %c0_92 = arith.constant 0 : index
    %53 = vector.load %arg9[%c0_89, %c2_90, %c1_91, %c0_92] : memref<2x10x10x8xf32, #tpu.memory_space<vmem>>, vector<2x8x8x8xf32>
    %54 = vector.shape_cast %53 : vector<2x8x8x8xf32> to vector<128x8xf32>
    %c0_93 = arith.constant 0 : index
    %c2_94 = arith.constant 2 : index
    %c2_95 = arith.constant 2 : index
    %c0_96 = arith.constant 0 : index
    %55 = vector.load %arg9[%c0_93, %c2_94, %c2_95, %c0_96] : memref<2x10x10x8xf32, #tpu.memory_space<vmem>>, vector<2x8x8x8xf32>
    %56 = vector.shape_cast %55 : vector<2x8x8x8xf32> to vector<128x8xf32>
    %57 = tpu.concatenate %40, %42, %44, %46, %48, %50, %52, %54, %56 in 1 : vector<128x8xf32>, vector<128x8xf32>, vector<128x8xf32>, vector<128x8xf32>, vector<128x8xf32>, vector<128x8xf32>, vector<128x8xf32>, vector<128x8xf32>, vector<128x8xf32> -> vector<128x72xf32>
    %c0_97 = arith.constant 0 : index
    %c0_98 = arith.constant 0 : index
    %58 = vector.load %arg6[%c0_97, %c0_98] : memref<72x8xf32, #tpu.memory_space<vmem>>, vector<72x8xf32>
    %cst_99 = arith.constant dense<0.000000e+00> : vector<128x8xf32>
    %59 = tpu.matmul %57, %58, %cst_99 {dimension_numbers = #tpu.dot_dimension_numbers<[1], [0], [0], [1], [0, 0, 1, 1], [], []>} : vector<128x72xf32>, vector<72x8xf32>, vector<128x8xf32> -> vector<128x8xf32>
    %c1_100 = arith.constant 1 : index
    %c0_101 = arith.constant 0 : index
    %60 = vector.load %arg7[%c1_100, %c0_101] : memref<3x8xf32, #tpu.memory_space<vmem>>, vector<1x8xf32>
    %61 = vector.broadcast %60 : vector<1x8xf32> to vector<128x8xf32>
    %62 = arith.addf %59, %61 : vector<128x8xf32>
    %cst_102 = arith.constant 0.000000e+00 : f32
    %63 = vector.broadcast %cst_102 : f32 to vector<128x8xf32>
    %64 = arith.maximumf %62, %63 : vector<128x8xf32>
    %65 = arith.addf %64, %30 : vector<128x8xf32>
    %cst_103 = arith.constant 0.000000e+00 : f32
    %66 = vector.broadcast %cst_103 : f32 to vector<128x8xf32>
    %67 = arith.maximumf %65, %66 : vector<128x8xf32>
    %68 = vector.shape_cast %67 : vector<128x8xf32> to vector<2x64x8xf32>
    %c0_104 = arith.constant 0 : index
    %c0_105 = arith.constant 0 : index
    %c0_106 = arith.constant 0 : index
    %69 = vector.load %arg8[%c0_104, %c0_105, %c0_106] : memref<2x64x8xf32, #tpu.memory_space<vmem>>, vector<2x64x8xf32>
    tpu.vector_store %arg8[%c0_104, %c0_105, %c0_106], %68 {strides = array<i32>} : memref<2x64x8xf32, #tpu.memory_space<vmem>>, vector<2x64x8xf32>,
    return
  }
  func.func @transform_0(%arg0: i32) -> (i32, i32, i32, i32) {
    %c0_i32 = arith.constant 0 : i32
    %c0_i32_0 = arith.constant 0 : i32
    %c0_i32_1 = arith.constant 0 : i32
    %c0_i32_2 = arith.constant 0 : i32
    return %arg0, %c0_i32, %c0_i32_0, %c0_i32_1 : i32, i32, i32, i32
  }
  func.func @transform_1(%arg0: i32) -> (i32, i32, i32, i32) {
    %c0_i32 = arith.constant 0 : i32
    %c0_i32_0 = arith.constant 0 : i32
    %c0_i32_1 = arith.constant 0 : i32
    %c0_i32_2 = arith.constant 0 : i32
    return %arg0, %c0_i32, %c0_i32_0, %c0_i32_1 : i32, i32, i32, i32
  }
  func.func @transform_2(%arg0: i32) -> (i32, i32, i32, i32) {
    %c0_i32 = arith.constant 0 : i32
    %c0_i32_0 = arith.constant 0 : i32
    %c0_i32_1 = arith.constant 0 : i32
    %c0_i32_2 = arith.constant 0 : i32
    return %arg0, %c0_i32, %c0_i32_0, %c0_i32_1 : i32, i32, i32, i32
  }
  func.func @transform_3(%arg0: i32) -> (i32, i32, i32, i32) {
    %c0_i32 = arith.constant 0 : i32
    %c0_i32_0 = arith.constant 0 : i32
    %c0_i32_1 = arith.constant 0 : i32
    %c0_i32_2 = arith.constant 0 : i32
    return %arg0, %c0_i32, %c0_i32_0, %c0_i32_1 : i32, i32, i32, i32
  }
  func.func @transform_4(%arg0: i32) -> (i32, i32) {
    %c0_i32 = arith.constant 0 : i32
    %c0_i32_0 = arith.constant 0 : i32
    %c0_i32_1 = arith.constant 0 : i32
    return %c0_i32, %c0_i32_0 : i32, i32
  }
  func.func @transform_5(%arg0: i32) -> (i32, i32) {
    %c0_i32 = arith.constant 0 : i32
    %c0_i32_0 = arith.constant 0 : i32
    %c0_i32_1 = arith.constant 0 : i32
    return %c0_i32, %c0_i32_0 : i32, i32
  }
  func.func @transform_6(%arg0: i32) -> (i32, i32) {
    %c0_i32 = arith.constant 0 : i32
    %c0_i32_0 = arith.constant 0 : i32
    %c0_i32_1 = arith.constant 0 : i32
    return %c0_i32, %c0_i32_0 : i32, i32
  }
  func.func @transform_7(%arg0: i32) -> (i32, i32, i32) {
    %c0_i32 = arith.constant 0 : i32
    %c0_i32_0 = arith.constant 0 : i32
    %c0_i32_1 = arith.constant 0 : i32
    return %arg0, %c0_i32, %c0_i32_0 : i32, i32, i32
  }
}

</mosaic_0001>

<llo_original>
// kernel: tpu_custom_call.1
$region0: #{tpu_custom_call.1}
  #allocation0 [shape = 'u32[]', space=smem, size = 0x4, offset = 0x4, fixed_abs, tag = 'smem constant byte address 0x4 - core index']
  #allocation1 [shape = 'u32[144,128]{1,0:T(1,128)}', space=vmem, size = 0x12000, scoped, tag = 'internal scratch']
  #allocation2 [shape = 'f32[2,10,10,8]{3,2,1,0:T(8,128)}', space=vmem, size = 0x28000, scoped, tag = 'scratch operand']
  %s0 = inlined_call_operand.vmem [shape: f32[2,9,9,4], index: 0, kind: input, shape index: {}]
  %s1 = inlined_call_operand.vmem [shape: f32[2,9,9,4], index: 1, kind: input, shape index: {}]
  %s2 = inlined_call_operand.vmem [shape: f32[2,9,9,4], index: 2, kind: input, shape index: {}]
  %s3 = inlined_call_operand.vmem [shape: f32[2,9,9,4], index: 3, kind: input, shape index: {}]
  %s4 = inlined_call_operand.vmem [shape: f32[36,16], index: 4, kind: input, shape index: {}]
  %s5 = inlined_call_operand.vmem [shape: f32[72,8], index: 5, kind: input, shape index: {}]
  %s6 = inlined_call_operand.vmem [shape: f32[3,8], index: 6, kind: input, shape index: {}]
  %s7 = inlined_call_operand.vmem [shape: f32[2,64,8], index: 7, kind: output, shape index: {}]
  %s8 = sld [smem:[#allocation0]]
  $region38: #{tpu_custom_call.1} parent=0
    _
  %s10 = ssub.s32 1, %s8
  %s11 = scalar_select 0, %s10, %s8
  // Predicated region
  $region2: #{tpu_custom_call.1} parent=0 // pred_check
    _
  $region3: #{tpu_custom_call.1} parent=0 // pred_check_branch
    %13 = sbr.rel (0) target = $region5
  $region4: #{tpu_custom_call.1} parent=0 // pred_region
    _
  $region5: #{tpu_custom_call.1} parent=0 // pred_fallthru
    _
  // Predicated region
  $region6: #{tpu_custom_call.1} parent=0 // pred_check
    _
  $region7: #{tpu_custom_call.1} parent=0 // pred_check_branch
    %15 = sbr.rel (0) target = $region9
  $region8: #{tpu_custom_call.1} parent=0 // pred_region
    _
  $region9: #{tpu_custom_call.1} parent=0 // pred_fallthru
    _
  // Predicated region
  $region10: #{tpu_custom_call.1} parent=0 // pred_check
    _
  $region11: #{tpu_custom_call.1} parent=0 // pred_check_branch
    %17 = sbr.rel (0) target = $region13
  $region12: #{tpu_custom_call.1} parent=0 // pred_region
    _
  $region13: #{tpu_custom_call.1} parent=0 // pred_fallthru
    _
  // Predicated region
  $region14: #{tpu_custom_call.1} parent=0 // pred_check
    _
  $region15: #{tpu_custom_call.1} parent=0 // pred_check_branch
    %19 = sbr.rel (0) target = $region17
  $region16: #{tpu_custom_call.1} parent=0 // pred_region
    _
  $region17: #{tpu_custom_call.1} parent=0 // pred_fallthru
    _
  // Predicated region
  $region18: #{tpu_custom_call.1} parent=0 // pred_check
    _
  $region19: #{tpu_custom_call.1} parent=0 // pred_check_branch
    %21 = sbr.rel (0) target = $region21
  $region20: #{tpu_custom_call.1} parent=0 // pred_region
    _
  $region21: #{tpu_custom_call.1} parent=0 // pred_fallthru
    _
  // Predicated region
  $region22: #{tpu_custom_call.1} parent=0 // pred_check
    _
  $region23: #{tpu_custom_call.1} parent=0 // pred_check_branch
    %23 = sbr.rel (0) target = $region25
  $region24: #{tpu_custom_call.1} parent=0 // pred_region
    _
  $region25: #{tpu_custom_call.1} parent=0 // pred_fallthru
    _
  // Predicated region
  $region26: #{tpu_custom_call.1} parent=0 // pred_check
    _
  $region27: #{tpu_custom_call.1} parent=0 // pred_check_branch
    %25 = sbr.rel (0) target = $region29
  $region28: #{tpu_custom_call.1} parent=0 // pred_region
    _
  $region29: #{tpu_custom_call.1} parent=0 // pred_fallthru
    _
  %v26 = vld [vmem:[%s0] sm:$0xff]
  %v27 = vld [vmem:[%s0 + $0x10] sm:$0xff]
  %v28 = vld [vmem:[%s0 + $0x20] sm:$0xff]
  %v29 = vld [vmem:[%s0 + $0x30] sm:$0xff]
  %v30 = vld [vmem:[%s0 + $0x40] sm:$0xff]
  %v31 = vld [vmem:[%s0 + $0x50] sm:$0xff]
  %v32 = vld [vmem:[%s0 + $0x60] sm:$0xff]
  %v33 = vld [vmem:[%s0 + $0x70] sm:$0xff]
  %v34 = vld [vmem:[%s0 + $0x90] sm:$0xff]
  %v35 = vld [vmem:[%s0 + $0xa0] sm:$0xff]
  %v36 = vld [vmem:[%s0 + $0xb0] sm:$0xff]
  %v37 = vld [vmem:[%s0 + $0xc0] sm:$0xff]
  %v38 = vld [vmem:[%s0 + $0xd0] sm:$0xff]
  %v39 = vld [vmem:[%s0 + $0xe0] sm:$0xff]
  %v40 = vld [vmem:[%s0 + $0xf0] sm:$0xff]
  %v41 = vld [vmem:[%s0 + $0x100] sm:$0xff]
  %v42 = vld [vmem:[%s1] sm:$0xff]
  %v43 = vld [vmem:[%s1 + $0x10] sm:$0xff]
  %v44 = vld [vmem:[%s1 + $0x20] sm:$0xff]
  %v45 = vld [vmem:[%s1 + $0x30] sm:$0xff]
  %v46 = vld [vmem:[%s1 + $0x40] sm:$0xff]
  %v47 = vld [vmem:[%s1 + $0x50] sm:$0xff]
  %v48 = vld [vmem:[%s1 + $0x60] sm:$0xff]
  %v49 = vld [vmem:[%s1 + $0x70] sm:$0xff]
  %v50 = vld [vmem:[%s1 + $0x90] sm:$0xff]
  %v51 = vld [vmem:[%s1 + $0xa0] sm:$0xff]
  %v52 = vld [vmem:[%s1 + $0xb0] sm:$0xff]
  %v53 = vld [vmem:[%s1 + $0xc0] sm:$0xff]
  %v54 = vld [vmem:[%s1 + $0xd0] sm:$0xff]
  %v55 = vld [vmem:[%s1 + $0xe0] sm:$0xff]
  %v56 = vld [vmem:[%s1 + $0xf0] sm:$0xff]
  %v57 = vld [vmem:[%s1 + $0x100] sm:$0xff]
  %v58 = vld [vmem:[%s0 + $0x1] sm:$0xff]
  %v59 = vld [vmem:[%s0 + $0x11] sm:$0xff]
  %v60 = vld [vmem:[%s0 + $0x21] sm:$0xff]
  %v61 = vld [vmem:[%s0 + $0x31] sm:$0xff]
  %v62 = vld [vmem:[%s0 + $0x41] sm:$0xff]
  %v63 = vld [vmem:[%s0 + $0x51] sm:$0xff]
  %v64 = vld [vmem:[%s0 + $0x61] sm:$0xff]
  %v65 = vld [vmem:[%s0 + $0x71] sm:$0xff]
  %v66 = vld [vmem:[%s0 + $0x91] sm:$0xff]
  %v67 = vld [vmem:[%s0 + $0xa1] sm:$0xff]
  %v68 = vld [vmem:[%s0 + $0xb1] sm:$0xff]
  %v69 = vld [vmem:[%s0 + $0xc1] sm:$0xff]
  %v70 = vld [vmem:[%s0 + $0xd1] sm:$0xff]
  %v71 = vld [vmem:[%s0 + $0xe1] sm:$0xff]
  %v72 = vld [vmem:[%s0 + $0xf1] sm:$0xff]
  %v73 = vld [vmem:[%s0 + $0x101] sm:$0xff]
  %v74 = vld [vmem:[%s2] sm:$0xff]
  %v75 = vld [vmem:[%s2 + $0x10] sm:$0xff]
  %v76 = vld [vmem:[%s2 + $0x20] sm:$0xff]
  %v77 = vld [vmem:[%s2 + $0x30] sm:$0xff]
  %v78 = vld [vmem:[%s2 + $0x40] sm:$0xff]
  %v79 = vld [vmem:[%s2 + $0x50] sm:$0xff]
  %v80 = vld [vmem:[%s2 + $0x60] sm:$0xff]
  %v81 = vld [vmem:[%s2 + $0x70] sm:$0xff]
  %v82 = vld [vmem:[%s2 + $0x90] sm:$0xff]
  %v83 = vld [vmem:[%s2 + $0xa0] sm:$0xff]
  %v84 = vld [vmem:[%s2 + $0xb0] sm:$0xff]
  %v85 = vld [vmem:[%s2 + $0xc0] sm:$0xff]
  %v86 = vld [vmem:[%s2 + $0xd0] sm:$0xff]
  %v87 = vld [vmem:[%s2 + $0xe0] sm:$0xff]
  %v88 = vld [vmem:[%s2 + $0xf0] sm:$0xff]
  %v89 = vld [vmem:[%s2 + $0x100] sm:$0xff]
  %v90 = vld [vmem:[%s3] sm:$0xff]
  %v91 = vld [vmem:[%s3 + $0x10] sm:$0xff]
  %v92 = vld [vmem:[%s3 + $0x20] sm:$0xff]
  %v93 = vld [vmem:[%s3 + $0x30] sm:$0xff]
  %v94 = vld [vmem:[%s3 + $0x40] sm:$0xff]
  %v95 = vld [vmem:[%s3 + $0x50] sm:$0xff]
  %v96 = vld [vmem:[%s3 + $0x60] sm:$0xff]
  %v97 = vld [vmem:[%s3 + $0x70] sm:$0xff]
  %v98 = vld [vmem:[%s3 + $0x90] sm:$0xff]
  %v99 = vld [vmem:[%s3 + $0xa0] sm:$0xff]
  %v100 = vld [vmem:[%s3 + $0xb0] sm:$0xff]
  %v101 = vld [vmem:[%s3 + $0xc0] sm:$0xff]
  %v102 = vld [vmem:[%s3 + $0xd0] sm:$0xff]
  %v103 = vld [vmem:[%s3 + $0xe0] sm:$0xff]
  %v104 = vld [vmem:[%s3 + $0xf0] sm:$0xff]
  %v105 = vld [vmem:[%s3 + $0x100] sm:$0xff]
  %v106 = vld [vmem:[%s2 + $0x1] sm:$0xff]
  %v107 = vld [vmem:[%s2 + $0x11] sm:$0xff]
  %v108 = vld [vmem:[%s2 + $0x21] sm:$0xff]
  %v109 = vld [vmem:[%s2 + $0x31] sm:$0xff]
  %v110 = vld [vmem:[%s2 + $0x41] sm:$0xff]
  %v111 = vld [vmem:[%s2 + $0x51] sm:$0xff]
  %v112 = vld [vmem:[%s2 + $0x61] sm:$0xff]
  %v113 = vld [vmem:[%s2 + $0x71] sm:$0xff]
  %v114 = vld [vmem:[%s2 + $0x91] sm:$0xff]
  %v115 = vld [vmem:[%s2 + $0xa1] sm:$0xff]
  %v116 = vld [vmem:[%s2 + $0xb1] sm:$0xff]
  %v117 = vld [vmem:[%s2 + $0xc1] sm:$0xff]
  %v118 = vld [vmem:[%s2 + $0xd1] sm:$0xff]
  %v119 = vld [vmem:[%s2 + $0xe1] sm:$0xff]
  %v120 = vld [vmem:[%s2 + $0xf1] sm:$0xff]
  %v121 = vld [vmem:[%s2 + $0x101] sm:$0xff]
  %s122 = scalar_lea.vmem %s0, 16
  %v123 = vld [vmem:[%s122] sm:$0xff]
  %v124 = vld [vmem:[%s122 + $0x10] sm:$0xff]
  %v125 = vld [vmem:[%s122 + $0x20] sm:$0xff]
  %v126 = vld [vmem:[%s122 + $0x30] sm:$0xff]
  %v127 = vld [vmem:[%s122 + $0x40] sm:$0xff]
  %v128 = vld [vmem:[%s122 + $0x50] sm:$0xff]
  %v129 = vld [vmem:[%s122 + $0x60] sm:$0xff]
  %v130 = vld [vmem:[%s122 + $0x70] sm:$0xff]
  %v131 = vld [vmem:[%s122 + $0x90] sm:$0xff]
  %v132 = vld [vmem:[%s122 + $0xa0] sm:$0xff]
  %v133 = vld [vmem:[%s122 + $0xb0] sm:$0xff]
  %v134 = vld [vmem:[%s122 + $0xc0] sm:$0xff]
  %v135 = vld [vmem:[%s122 + $0xd0] sm:$0xff]
  %v136 = vld [vmem:[%s122 + $0xe0] sm:$0xff]
  %v137 = vld [vmem:[%s122 + $0xf0] sm:$0xff]
  %v138 = vld [vmem:[%s122 + $0x100] sm:$0xff]
  %s139 = scalar_lea.vmem %s1, 16
  %v140 = vld [vmem:[%s139] sm:$0xff]
  %v141 = vld [vmem:[%s139 + $0x10] sm:$0xff]
  %v142 = vld [vmem:[%s139 + $0x20] sm:$0xff]
  %v143 = vld [vmem:[%s139 + $0x30] sm:$0xff]
  %v144 = vld [vmem:[%s139 + $0x40] sm:$0xff]
  %v145 = vld [vmem:[%s139 + $0x50] sm:$0xff]
  %v146 = vld [vmem:[%s139 + $0x60] sm:$0xff]
  %v147 = vld [vmem:[%s139 + $0x70] sm:$0xff]
  %v148 = vld [vmem:[%s139 + $0x90] sm:$0xff]
  %v149 = vld [vmem:[%s139 + $0xa0] sm:$0xff]
  %v150 = vld [vmem:[%s139 + $0xb0] sm:$0xff]
  %v151 = vld [vmem:[%s139 + $0xc0] sm:$0xff]
  %v152 = vld [vmem:[%s139 + $0xd0] sm:$0xff]
  %v153 = vld [vmem:[%s139 + $0xe0] sm:$0xff]
  %v154 = vld [vmem:[%s139 + $0xf0] sm:$0xff]
  %v155 = vld [vmem:[%s139 + $0x100] sm:$0xff]
  %v156 = vld [vmem:[%s122 + $0x1] sm:$0xff]
  %v157 = vld [vmem:[%s122 + $0x11] sm:$0xff]
  %v158 = vld [vmem:[%s122 + $0x21] sm:$0xff]
  %v159 = vld [vmem:[%s122 + $0x31] sm:$0xff]
  %v160 = vld [vmem:[%s122 + $0x41] sm:$0xff]
  %v161 = vld [vmem:[%s122 + $0x51] sm:$0xff]
  %v162 = vld [vmem:[%s122 + $0x61] sm:$0xff]
  %v163 = vld [vmem:[%s122 + $0x71] sm:$0xff]
  %v164 = vld [vmem:[%s122 + $0x91] sm:$0xff]
  %v165 = vld [vmem:[%s122 + $0xa1] sm:$0xff]
  %v166 = vld [vmem:[%s122 + $0xb1] sm:$0xff]
  %v167 = vld [vmem:[%s122 + $0xc1] sm:$0xff]
  %v168 = vld [vmem:[%s122 + $0xd1] sm:$0xff]
  %v169 = vld [vmem:[%s122 + $0xe1] sm:$0xff]
  %v170 = vld [vmem:[%s122 + $0xf1] sm:$0xff]
  %v171 = vld [vmem:[%s122 + $0x101] sm:$0xff]
  %188 = vrot.lane.b32.xlu0 %v42, 4
  %v189 = vpop.permute.xlu0 %188
  %190 = vrot.lane.b32.xlu0 %v43, 4
  %v191 = vpop.permute.xlu0 %190
  %192 = vrot.lane.b32.xlu0 %v44, 4
  %v193 = vpop.permute.xlu0 %192
  %194 = vrot.lane.b32.xlu0 %v45, 4
  %v195 = vpop.permute.xlu0 %194
  %196 = vrot.lane.b32.xlu0 %v46, 4
  %v197 = vpop.permute.xlu0 %196
  %198 = vrot.lane.b32.xlu0 %v47, 4
  %v199 = vpop.permute.xlu0 %198
  %200 = vrot.lane.b32.xlu0 %v48, 4
  %v201 = vpop.permute.xlu0 %200
  %202 = vrot.lane.b32.xlu0 %v49, 4
  %v203 = vpop.permute.xlu0 %202
  %204 = vrot.lane.b32.xlu0 %v50, 4
  %v205 = vpop.permute.xlu0 %204
  %206 = vrot.lane.b32.xlu0 %v51, 4
  %v207 = vpop.permute.xlu0 %206
  %208 = vrot.lane.b32.xlu0 %v52, 4
  %v209 = vpop.permute.xlu0 %208
  %210 = vrot.lane.b32.xlu0 %v53, 4
  %v211 = vpop.permute.xlu0 %210
  %212 = vrot.lane.b32.xlu0 %v54, 4
  %v213 = vpop.permute.xlu0 %212
  %214 = vrot.lane.b32.xlu0 %v55, 4
  %v215 = vpop.permute.xlu0 %214
  %216 = vrot.lane.b32.xlu0 %v56, 4
  %v217 = vpop.permute.xlu0 %216
  %218 = vrot.lane.b32.xlu0 %v57, 4
  %v219 = vpop.permute.xlu0 %218
  %252 = vrot.lane.b32.xlu0 %v58, 8
  %v253 = vpop.permute.xlu0 %252
  %254 = vrot.lane.b32.xlu0 %v59, 8
  %v255 = vpop.permute.xlu0 %254
  %256 = vrot.lane.b32.xlu0 %v60, 8
  %v257 = vpop.permute.xlu0 %256
  %258 = vrot.lane.b32.xlu0 %v61, 8
  %v259 = vpop.permute.xlu0 %258
  %260 = vrot.lane.b32.xlu0 %v62, 8
  %v261 = vpop.permute.xlu0 %260
  %262 = vrot.lane.b32.xlu0 %v63, 8
  %v263 = vpop.permute.xlu0 %262
  %264 = vrot.lane.b32.xlu0 %v64, 8
  %v265 = vpop.permute.xlu0 %264
  %266 = vrot.lane.b32.xlu0 %v65, 8
  %v267 = vpop.permute.xlu0 %266
  %268 = vrot.lane.b32.xlu0 %v66, 8
  %v269 = vpop.permute.xlu0 %268
  %270 = vrot.lane.b32.xlu0 %v67, 8
  %v271 = vpop.permute.xlu0 %270
  %272 = vrot.lane.b32.xlu0 %v68, 8
  %v273 = vpop.permute.xlu0 %272
  %274 = vrot.lane.b32.xlu0 %v69, 8
  %v275 = vpop.permute.xlu0 %274
  %276 = vrot.lane.b32.xlu0 %v70, 8
  %v277 = vpop.permute.xlu0 %276
  %278 = vrot.lane.b32.xlu0 %v71, 8
  %v279 = vpop.permute.xlu0 %278
  %280 = vrot.lane.b32.xlu0 %v72, 8
  %v281 = vpop.permute.xlu0 %280
  %282 = vrot.lane.b32.xlu0 %v73, 8
  %v283 = vpop.permute.xlu0 %282
  %316 = vrot.lane.b32.xlu0 %v74, 12
  %v317 = vpop.permute.xlu0 %316
  %318 = vrot.lane.b32.xlu0 %v75, 12
  %v319 = vpop.permute.xlu0 %318
  %320 = vrot.lane.b32.xlu0 %v76, 12
  %v321 = vpop.permute.xlu0 %320
  %322 = vrot.lane.b32.xlu0 %v77, 12
  %v323 = vpop.permute.xlu0 %322
  %324 = vrot.lane.b32.xlu0 %v78, 12
  %v325 = vpop.permute.xlu0 %324
  %326 = vrot.lane.b32.xlu0 %v79, 12
  %v327 = vpop.permute.xlu0 %326
  %328 = vrot.lane.b32.xlu0 %v80, 12
  %v329 = vpop.permute.xlu0 %328
  %330 = vrot.lane.b32.xlu0 %v81, 12
  %v331 = vpop.permute.xlu0 %330
  %332 = vrot.lane.b32.xlu0 %v82, 12
  %v333 = vpop.permute.xlu0 %332
  %334 = vrot.lane.b32.xlu0 %v83, 12
  %v335 = vpop.permute.xlu0 %334
  %336 = vrot.lane.b32.xlu0 %v84, 12
  %v337 = vpop.permute.xlu0 %336
  %338 = vrot.lane.b32.xlu0 %v85, 12
  %v339 = vpop.permute.xlu0 %338
  %340 = vrot.lane.b32.xlu0 %v86, 12
  %v341 = vpop.permute.xlu0 %340
  %342 = vrot.lane.b32.xlu0 %v87, 12
  %v343 = vpop.permute.xlu0 %342
  %344 = vrot.lane.b32.xlu0 %v88, 12
  %v345 = vpop.permute.xlu0 %344
  %346 = vrot.lane.b32.xlu0 %v89, 12
  %v347 = vpop.permute.xlu0 %346
  %380 = vrot.lane.b32.xlu0 %v90, 16
  %v381 = vpop.permute.xlu0 %380
  %382 = vrot.lane.b32.xlu0 %v91, 16
  %v383 = vpop.permute.xlu0 %382
  %384 = vrot.lane.b32.xlu0 %v92, 16
  %v385 = vpop.permute.xlu0 %384
  %386 = vrot.lane.b32.xlu0 %v93, 16
  %v387 = vpop.permute.xlu0 %386
  %388 = vrot.lane.b32.xlu0 %v94, 16
  %v389 = vpop.permute.xlu0 %388
  %390 = vrot.lane.b32.xlu0 %v95, 16
  %v391 = vpop.permute.xlu0 %390
  %392 = vrot.lane.b32.xlu0 %v96, 16
  %v393 = vpop.permute.xlu0 %392
  %394 = vrot.lane.b32.xlu0 %v97, 16
  %v395 = vpop.permute.xlu0 %394
  %396 = vrot.lane.b32.xlu0 %v98, 16
  %v397 = vpop.permute.xlu0 %396
  %398 = vrot.lane.b32.xlu0 %v99, 16
  %v399 = vpop.permute.xlu0 %398
  %400 = vrot.lane.b32.xlu0 %v100, 16
  %v401 = vpop.permute.xlu0 %400
  %402 = vrot.lane.b32.xlu0 %v101, 16
  %v403 = vpop.permute.xlu0 %402
  %404 = vrot.lane.b32.xlu0 %v102, 16
  %v405 = vpop.permute.xlu0 %404
  %406 = vrot.lane.b32.xlu0 %v103, 16
  %v407 = vpop.permute.xlu0 %406
  %408 = vrot.lane.b32.xlu0 %v104, 16
  %v409 = vpop.permute.xlu0 %408
  %410 = vrot.lane.b32.xlu0 %v105, 16
  %v411 = vpop.permute.xlu0 %410
  %444 = vrot.lane.b32.xlu0 %v106, 20
  %v445 = vpop.permute.xlu0 %444
  %446 = vrot.lane.b32.xlu0 %v107, 20
  %v447 = vpop.permute.xlu0 %446
  %448 = vrot.lane.b32.xlu0 %v108, 20
  %v449 = vpop.permute.xlu0 %448
  %450 = vrot.lane.b32.xlu0 %v109, 20
  %v451 = vpop.permute.xlu0 %450
  %452 = vrot.lane.b32.xlu0 %v110, 20
  %v453 = vpop.permute.xlu0 %452
  %454 = vrot.lane.b32.xlu0 %v111, 20
  %v455 = vpop.permute.xlu0 %454
  %456 = vrot.lane.b32.xlu0 %v112, 20
  %v457 = vpop.permute.xlu0 %456
  %458 = vrot.lane.b32.xlu0 %v113, 20
  %v459 = vpop.permute.xlu0 %458
  %460 = vrot.lane.b32.xlu0 %v114, 20
  %v461 = vpop.permute.xlu0 %460
  %462 = vrot.lane.b32.xlu0 %v115, 20
  %v463 = vpop.permute.xlu0 %462
  %464 = vrot.lane.b32.xlu0 %v116, 20
  %v465 = vpop.permute.xlu0 %464
  %466 = vrot.lane.b32.xlu0 %v117, 20
  %v467 = vpop.permute.xlu0 %466
  %468 = vrot.lane.b32.xlu0 %v118, 20
  %v469 = vpop.permute.xlu0 %468
  %470 = vrot.lane.b32.xlu0 %v119, 20
  %v471 = vpop.permute.xlu0 %470
  %472 = vrot.lane.b32.xlu0 %v120, 20
  %v473 = vpop.permute.xlu0 %472
  %474 = vrot.lane.b32.xlu0 %v121, 20
  %v475 = vpop.permute.xlu0 %474
  %508 = vrot.lane.b32.xlu0 %v123, 24
  %v509 = vpop.permute.xlu0 %508
  %510 = vrot.lane.b32.xlu0 %v124, 24
  %v511 = vpop.permute.xlu0 %510
  %512 = vrot.lane.b32.xlu0 %v125, 24
  %v513 = vpop.permute.xlu0 %512
  %514 = vrot.lane.b32.xlu0 %v126, 24
  %v515 = vpop.permute.xlu0 %514
  %516 = vrot.lane.b32.xlu0 %v127, 24
  %v517 = vpop.permute.xlu0 %516
  %518 = vrot.lane.b32.xlu0 %v128, 24
  %v519 = vpop.permute.xlu0 %518
  %520 = vrot.lane.b32.xlu0 %v129, 24
  %v521 = vpop.permute.xlu0 %520
  %522 = vrot.lane.b32.xlu0 %v130, 24
  %v523 = vpop.permute.xlu0 %522
  %524 = vrot.lane.b32.xlu0 %v131, 24
  %v525 = vpop.permute.xlu0 %524
  %526 = vrot.lane.b32.xlu0 %v132, 24
  %v527 = vpop.permute.xlu0 %526
  %528 = vrot.lane.b32.xlu0 %v133, 24
  %v529 = vpop.permute.xlu0 %528
  %530 = vrot.lane.b32.xlu0 %v134, 24
  %v531 = vpop.permute.xlu0 %530
  %532 = vrot.lane.b32.xlu0 %v135, 24
  %v533 = vpop.permute.xlu0 %532
  %534 = vrot.lane.b32.xlu0 %v136, 24
  %v535 = vpop.permute.xlu0 %534
  %536 = vrot.lane.b32.xlu0 %v137, 24
  %v537 = vpop.permute.xlu0 %536
  %538 = vrot.lane.b32.xlu0 %v138, 24
  %v539 = vpop.permute.xlu0 %538
  %572 = vrot.lane.b32.xlu0 %v140, 28
  %v573 = vpop.permute.xlu0 %572
  %574 = vrot.lane.b32.xlu0 %v141, 28
  %v575 = vpop.permute.xlu0 %574
  %576 = vrot.lane.b32.xlu0 %v142, 28
  %v577 = vpop.permute.xlu0 %576
  %578 = vrot.lane.b32.xlu0 %v143, 28
  %v579 = vpop.permute.xlu0 %578
  %580 = vrot.lane.b32.xlu0 %v144, 28
  %v581 = vpop.permute.xlu0 %580
  %582 = vrot.lane.b32.xlu0 %v145, 28
  %v583 = vpop.permute.xlu0 %582
  %584 = vrot.lane.b32.xlu0 %v146, 28
  %v585 = vpop.permute.xlu0 %584
  %586 = vrot.lane.b32.xlu0 %v147, 28
  %v587 = vpop.permute.xlu0 %586
  %588 = vrot.lane.b32.xlu0 %v148, 28
  %v589 = vpop.permute.xlu0 %588
  %590 = vrot.lane.b32.xlu0 %v149, 28
  %v591 = vpop.permute.xlu0 %590
  %592 = vrot.lane.b32.xlu0 %v150, 28
  %v593 = vpop.permute.xlu0 %592
  %594 = vrot.lane.b32.xlu0 %v151, 28
  %v595 = vpop.permute.xlu0 %594
  %596 = vrot.lane.b32.xlu0 %v152, 28
  %v597 = vpop.permute.xlu0 %596
  %598 = vrot.lane.b32.xlu0 %v153, 28
  %v599 = vpop.permute.xlu0 %598
  %600 = vrot.lane.b32.xlu0 %v154, 28
  %v601 = vpop.permute.xlu0 %600
  %602 = vrot.lane.b32.xlu0 %v155, 28
  %v603 = vpop.permute.xlu0 %602
  %636 = vrot.lane.b32.xlu0 %v156, 32
  %v637 = vpop.permute.xlu0 %636
  %638 = vrot.lane.b32.xlu0 %v157, 32
  %v639 = vpop.permute.xlu0 %638
  %640 = vrot.lane.b32.xlu0 %v158, 32
  %v641 = vpop.permute.xlu0 %640
  %642 = vrot.lane.b32.xlu0 %v159, 32
  %v643 = vpop.permute.xlu0 %642
  %644 = vrot.lane.b32.xlu0 %v160, 32
  %v645 = vpop.permute.xlu0 %644
  %646 = vrot.lane.b32.xlu0 %v161, 32
  %v647 = vpop.permute.xlu0 %646
  %648 = vrot.lane.b32.xlu0 %v162, 32
  %v649 = vpop.permute.xlu0 %648
  %650 = vrot.lane.b32.xlu0 %v163, 32
  %v651 = vpop.permute.xlu0 %650
  %652 = vrot.lane.b32.xlu0 %v164, 32
  %v653 = vpop.permute.xlu0 %652
  %654 = vrot.lane.b32.xlu0 %v165, 32
  %v655 = vpop.permute.xlu0 %654
  %656 = vrot.lane.b32.xlu0 %v166, 32
  %v657 = vpop.permute.xlu0 %656
  %658 = vrot.lane.b32.xlu0 %v167, 32
  %v659 = vpop.permute.xlu0 %658
  %660 = vrot.lane.b32.xlu0 %v168, 32
  %v661 = vpop.permute.xlu0 %660
  %662 = vrot.lane.b32.xlu0 %v169, 32
  %v663 = vpop.permute.xlu0 %662
  %664 = vrot.lane.b32.xlu0 %v170, 32
  %v665 = vpop.permute.xlu0 %664
  %666 = vrot.lane.b32.xlu0 %v171, 32
  %v667 = vpop.permute.xlu0 %666
  %vm684 = vcmask 31744
  %v685 = vsel %vm684, %v26, %v189
  %v686 = vsel %vm684, %v27, %v191
  %v687 = vsel %vm684, %v28, %v193
  %v688 = vsel %vm684, %v29, %v195
  %v689 = vsel %vm684, %v30, %v197
  %v690 = vsel %vm684, %v31, %v199
  %v691 = vsel %vm684, %v32, %v201
  %v692 = vsel %vm684, %v33, %v203
  %v693 = vsel %vm684, %v34, %v205
  %v694 = vsel %vm684, %v35, %v207
  %v695 = vsel %vm684, %v36, %v209
  %v696 = vsel %vm684, %v37, %v211
  %v697 = vsel %vm684, %v38, %v213
  %v698 = vsel %vm684, %v39, %v215
  %v699 = vsel %vm684, %v40, %v217
  %v700 = vsel %vm684, %v41, %v219
  %vm701 = vcmask 64512
  %v702 = vsel %vm701, %v685, %v253
  %v703 = vsel %vm701, %v686, %v255
  %v704 = vsel %vm701, %v687, %v257
  %v705 = vsel %vm701, %v688, %v259
  %v706 = vsel %vm701, %v689, %v261
  %v707 = vsel %vm701, %v690, %v263
  %v708 = vsel %vm701, %v691, %v265
  %v709 = vsel %vm701, %v692, %v267
  %v710 = vsel %vm701, %v693, %v269
  %v711 = vsel %vm701, %v694, %v271
  %v712 = vsel %vm701, %v695, %v273
  %v713 = vsel %vm701, %v696, %v275
  %v714 = vsel %vm701, %v697, %v277
  %v715 = vsel %vm701, %v698, %v279
  %v716 = vsel %vm701, %v699, %v281
  %v717 = vsel %vm701, %v700, %v283
  %vm718 = vcmask 97280
  %v719 = vsel %vm718, %v702, %v317
  %v720 = vsel %vm718, %v703, %v319
  %v721 = vsel %vm718, %v704, %v321
  %v722 = vsel %vm718, %v705, %v323
  %v723 = vsel %vm718, %v706, %v325
  %v724 = vsel %vm718, %v707, %v327
  %v725 = vsel %vm718, %v708, %v329
  %v726 = vsel %vm718, %v709, %v331
  %v727 = vsel %vm718, %v710, %v333
  %v728 = vsel %vm718, %v711, %v335
  %v729 = vsel %vm718, %v712, %v337
  %v730 = vsel %vm718, %v713, %v339
  %v731 = vsel %vm718, %v714, %v341
  %v732 = vsel %vm718, %v715, %v343
  %v733 = vsel %vm718, %v716, %v345
  %v734 = vsel %vm718, %v717, %v347
  %vm735 = vcmask 130048
  %v736 = vsel %vm735, %v719, %v381
  %v737 = vsel %vm735, %v720, %v383
  %v738 = vsel %vm735, %v721, %v385
  %v739 = vsel %vm735, %v722, %v387
  %v740 = vsel %vm735, %v723, %v389
  %v741 = vsel %vm735, %v724, %v391
  %v742 = vsel %vm735, %v725, %v393
  %v743 = vsel %vm735, %v726, %v395
  %v744 = vsel %vm735, %v727, %v397
  %v745 = vsel %vm735, %v728, %v399
  %v746 = vsel %vm735, %v729, %v401
  %v747 = vsel %vm735, %v730, %v403
  %v748 = vsel %vm735, %v731, %v405
  %v749 = vsel %vm735, %v732, %v407
  %v750 = vsel %vm735, %v733, %v409
  %v751 = vsel %vm735, %v734, %v411
  %vm752 = vcmask 162816
  %v753 = vsel %vm752, %v736, %v445
  %v754 = vsel %vm752, %v737, %v447
  %v755 = vsel %vm752, %v738, %v449
  %v756 = vsel %vm752, %v739, %v451
  %v757 = vsel %vm752, %v740, %v453
  %v758 = vsel %vm752, %v741, %v455
  %v759 = vsel %vm752, %v742, %v457
  %v760 = vsel %vm752, %v743, %v459
  %v761 = vsel %vm752, %v744, %v461
  %v762 = vsel %vm752, %v745, %v463
  %v763 = vsel %vm752, %v746, %v465
  %v764 = vsel %vm752, %v747, %v467
  %v765 = vsel %vm752, %v748, %v469
  %v766 = vsel %vm752, %v749, %v471
  %v767 = vsel %vm752, %v750, %v473
  %v768 = vsel %vm752, %v751, %v475
  %vm769 = vcmask 195584
  %v770 = vsel %vm769, %v753, %v509
  %v771 = vsel %vm769, %v754, %v511
  %v772 = vsel %vm769, %v755, %v513
  %v773 = vsel %vm769, %v756, %v515
  %v774 = vsel %vm769, %v757, %v517
  %v775 = vsel %vm769, %v758, %v519
  %v776 = vsel %vm769, %v759, %v521
  %v777 = vsel %vm769, %v760, %v523
  %v778 = vsel %vm769, %v761, %v525
  %v779 = vsel %vm769, %v762, %v527
  %v780 = vsel %vm769, %v763, %v529
  %v781 = vsel %vm769, %v764, %v531
  %v782 = vsel %vm769, %v765, %v533
  %v783 = vsel %vm769, %v766, %v535
  %v784 = vsel %vm769, %v767, %v537
  %v785 = vsel %vm769, %v768, %v539
  %vm786 = vcmask 228352
  %v787 = vsel %vm786, %v770, %v573
  %v788 = vsel %vm786, %v771, %v575
  %v789 = vsel %vm786, %v772, %v577
  %v790 = vsel %vm786, %v773, %v579
  %v791 = vsel %vm786, %v774, %v581
  %v792 = vsel %vm786, %v775, %v583
  %v793 = vsel %vm786, %v776, %v585
  %v794 = vsel %vm786, %v777, %v587
  %v795 = vsel %vm786, %v778, %v589
  %v796 = vsel %vm786, %v779, %v591
  %v797 = vsel %vm786, %v780, %v593
  %v798 = vsel %vm786, %v781, %v595
  %v799 = vsel %vm786, %v782, %v597
  %v800 = vsel %vm786, %v783, %v599
  %v801 = vsel %vm786, %v784, %v601
  %v802 = vsel %vm786, %v785, %v603
  %vm803 = vcmask 261120
  %v804 = vsel %vm803, %v787, %v637
  %v805 = vsel %vm803, %v788, %v639
  %v806 = vsel %vm803, %v789, %v641
  %v807 = vsel %vm803, %v790, %v643
  %v808 = vsel %vm803, %v791, %v645
  %v809 = vsel %vm803, %v792, %v647
  %v810 = vsel %vm803, %v793, %v649
  %v811 = vsel %vm803, %v794, %v651
  %v812 = vsel %vm803, %v795, %v653
  %v813 = vsel %vm803, %v796, %v655
  %v814 = vsel %vm803, %v797, %v657
  %v815 = vsel %vm803, %v798, %v659
  %v816 = vsel %vm803, %v799, %v661
  %v817 = vsel %vm803, %v800, %v663
  %v818 = vsel %vm803, %v801, %v665
  %v819 = vsel %vm803, %v802, %v667
  %v820 = vld [vmem:[%s4] sm:$0xff]
  %v821 = vld [vmem:[%s4 + $0x8] sm:$0xff]
  %v822 = vld [vmem:[%s4 + $0x10] sm:$0xff]
  %v823 = vld [vmem:[%s4 + $0x18] sm:$0xff]
  %v824 = vld [vmem:[%s4 + $0x20] sm:$0xf]
  %vm825 = vcmask 293888
  %v827 = vsel %vm825, %v804, 0
  %v830 = vsel %vm825, %v805, 0
  %v833 = vsel %vm825, %v806, 0
  %v836 = vsel %vm825, %v807, 0
  %v839 = vsel %vm825, %v808, 0
  %v842 = vsel %vm825, %v809, 0
  %v845 = vsel %vm825, %v810, 0
  %v848 = vsel %vm825, %v811, 0
  %v851 = vsel %vm825, %v812, 0
  %v854 = vsel %vm825, %v813, 0
  %v857 = vsel %vm825, %v814, 0
  %v860 = vsel %vm825, %v815, 0
  %v863 = vsel %vm825, %v816, 0
  %v866 = vsel %vm825, %v817, 0
  %v869 = vsel %vm825, %v818, 0
  %v872 = vsel %vm825, %v819, 0
  %vm874 = vcmask 1043456
  %v876 = vsel %vm874, %v824, 0
  %878 = vmatprep.subr.mxu0 0.0
  %879 = vmatpush1.msra.mxu0 0.0
  %880 = vmatprep.subr.mxu0 0.0
  %881 = vmatpush1.msra.mxu0 0.0
  %882 = vmatprep.subr.mxu0 0.0
  %883 = vmatpush1.msra.mxu0 0.0
  %884 = vmatprep.subr.mxu0 0.0
  %885 = vmatpush1.msra.mxu0 0.0
  %886 = vmatprep.subr.mxu0 0.0
  %887 = vmatpush1.msra.mxu0 0.0
  %888 = vmatprep.subr.mxu0 0.0
  %889 = vmatpush1.msra.mxu0 0.0
  %890 = vmatprep.subr.mxu0 0.0
  %891 = vmatpush1.msra.mxu0 0.0
  %892 = vmatprep.subr.mxu0 0.0
  %893 = vmatpush1.msra.mxu0 0.0
  %894 = vmatprep.subr.mxu0 0.0
  %895 = vmatpush1.msra.mxu0 0.0
  %896 = vmatprep.subr.mxu0 0.0
  %897 = vmatpush1.msra.mxu0 0.0
  %898 = vmatprep.subr.mxu0 0.0
  %899 = vmatpush1.msra.mxu0 0.0
  %900 = vmatprep.subr.mxu0 0.0
  %901 = vmatpush1.msra.mxu0 %v876
  %902 = vmatprep.subr.mxu0 0.0
  %903 = vmatpush1.msra.mxu0 %v823
  %904 = vmatprep.subr.mxu0 0.0
  %905 = vmatpush1.msra.mxu0 %v822
  %906 = vmatprep.subr.mxu0 0.0
  %907 = vmatpush1.msra.mxu0 %v821
  %908 = vmatprep.subr.mxu0 0.0
  %909 = vmatpush1.msra.mxu0 %v820
  %910 = vmatprep.subr.mxu0 0.0
  %911 = vmatpush2.msra.mxu0 0.0
  %912 = vmatprep.subr.mxu0 0.0
  %913 = vmatpush2.msra.mxu0 0.0
  %914 = vmatprep.subr.mxu0 0.0
  %915 = vmatpush2.msra.mxu0 0.0
  %916 = vmatprep.subr.mxu0 0.0
  %917 = vmatpush2.msra.mxu0 0.0
  %918 = vmatprep.subr.mxu0 0.0
  %919 = vmatpush2.msra.mxu0 0.0
  %920 = vmatprep.subr.mxu0 0.0
  %921 = vmatpush2.msra.mxu0 0.0
  %922 = vmatprep.subr.mxu0 0.0
  %923 = vmatpush2.msra.mxu0 0.0
  %924 = vmatprep.subr.mxu0 0.0
  %925 = vmatpush2.msra.mxu0 0.0
  %926 = vmatprep.subr.mxu0 0.0
  %927 = vmatpush2.msra.mxu0 0.0
  %928 = vmatprep.subr.mxu0 0.0
  %929 = vmatpush2.msra.mxu0 0.0
  %930 = vmatprep.subr.mxu0 0.0
  %931 = vmatpush2.msra.mxu0 0.0
  %932 = vmatprep.subr.mxu0 0.0
  %933 = vmatpush2.msra.mxu0 0.0
  %934 = vmatprep.subr.mxu0 0.0
  %935 = vmatpush2.msra.mxu0 0.0
  %936 = vmatprep.subr.mxu0 0.0
  %937 = vmatpush2.msra.mxu0 0.0
  %938 = vmatprep.subr.mxu0 0.0
  %939 = vmatpush2.msra.mxu0 0.0
  %940 = vmatprep.subr.mxu0 0.0
  %941 = vmatpush2.msra.mxu0 0.0
  %942 = vmatprep.mubr.f32.mxu0 0.0
  %943 = vmatmul.mubr.f32.gmra.mxu0 %v827
  %v944 = vpop.f32.mrf.mxu0
  %v945 = vadd.f32 0.0, %v944
  %v946 = vpop.f32.mrf.mxu0
  %947 = vmatprep.mubr.f32.mxu0 0.0
  %948 = vmatmul.mubr.f32.gmra.mxu0 %v830
  %v949 = vpop.f32.mrf.mxu0
  %v950 = vadd.f32 0.0, %v949
  %v951 = vpop.f32.mrf.mxu0
  %952 = vmatprep.mubr.f32.mxu0 0.0
  %953 = vmatmul.mubr.f32.gmra.mxu0 %v833
  %v954 = vpop.f32.mrf.mxu0
  %v955 = vadd.f32 0.0, %v954
  %v956 = vpop.f32.mrf.mxu0
  %957 = vmatprep.mubr.f32.mxu0 0.0
  %958 = vmatmul.mubr.f32.gmra.mxu0 %v836
  %v959 = vpop.f32.mrf.mxu0
  %v960 = vadd.f32 0.0, %v959
  %v961 = vpop.f32.mrf.mxu0
  %962 = vmatprep.mubr.f32.mxu0 0.0
  %963 = vmatmul.mubr.f32.gmra.mxu0 %v839
  %v964 = vpop.f32.mrf.mxu0
  %v965 = vadd.f32 0.0, %v964
  %v966 = vpop.f32.mrf.mxu0
  %967 = vmatprep.mubr.f32.mxu0 0.0
  %968 = vmatmul.mubr.f32.gmra.mxu0 %v842
  %v969 = vpop.f32.mrf.mxu0
  %v970 = vadd.f32 0.0, %v969
  %v971 = vpop.f32.mrf.mxu0
  %972 = vmatprep.mubr.f32.mxu0 0.0
  %973 = vmatmul.mubr.f32.gmra.mxu0 %v845
  %v974 = vpop.f32.mrf.mxu0
  %v975 = vadd.f32 0.0, %v974
  %v976 = vpop.f32.mrf.mxu0
  %977 = vmatprep.mubr.f32.mxu0 0.0
  %978 = vmatmul.mubr.f32.gmra.mxu0 %v848
  %v979 = vpop.f32.mrf.mxu0
  %v980 = vadd.f32 0.0, %v979
  %v981 = vpop.f32.mrf.mxu0
  %982 = vmatprep.mubr.f32.mxu0 0.0
  %983 = vmatmul.mubr.f32.gmra.mxu0 %v851
  %v984 = vpop.f32.mrf.mxu0
  %v985 = vadd.f32 0.0, %v984
  %v986 = vpop.f32.mrf.mxu0
  %987 = vmatprep.mubr.f32.mxu0 0.0
  %988 = vmatmul.mubr.f32.gmra.mxu0 %v854
  %v989 = vpop.f32.mrf.mxu0
  %v990 = vadd.f32 0.0, %v989
  %v991 = vpop.f32.mrf.mxu0
  %992 = vmatprep.mubr.f32.mxu0 0.0
  %993 = vmatmul.mubr.f32.gmra.mxu0 %v857
  %v994 = vpop.f32.mrf.mxu0
  %v995 = vadd.f32 0.0, %v994
  %v996 = vpop.f32.mrf.mxu0
  %997 = vmatprep.mubr.f32.mxu0 0.0
  %998 = vmatmul.mubr.f32.gmra.mxu0 %v860
  %v999 = vpop.f32.mrf.mxu0
  %v1000 = vadd.f32 0.0, %v999
  %v1001 = vpop.f32.mrf.mxu0
  %1002 = vmatprep.mubr.f32.mxu0 0.0
  %1003 = vmatmul.mubr.f32.gmra.mxu0 %v863
  %v1004 = vpop.f32.mrf.mxu0
  %v1005 = vadd.f32 0.0, %v1004
  %v1006 = vpop.f32.mrf.mxu0
  %1007 = vmatprep.mubr.f32.mxu0 0.0
  %1008 = vmatmul.mubr.f32.gmra.mxu0 %v866
  %v1009 = vpop.f32.mrf.mxu0
  %v1010 = vadd.f32 0.0, %v1009
  %v1011 = vpop.f32.mrf.mxu0
  %1012 = vmatprep.mubr.f32.mxu0 0.0
  %1013 = vmatmul.mubr.f32.gmra.mxu0 %v869
  %v1014 = vpop.f32.mrf.mxu0
  %v1015 = vadd.f32 0.0, %v1014
  %v1016 = vpop.f32.mrf.mxu0
  %1017 = vmatprep.mubr.f32.mxu0 0.0
  %1018 = vmatmul.mubr.f32.gmra.mxu0 %v872
  %v1019 = vpop.f32.mrf.mxu0
  %v1020 = vadd.f32 0.0, %v1019
  %v1021 = vpop.f32.mrf.mxu0
  %1022 = vdwg.mxu0
  %v1023 = vld [vmem:[%s6] sm:$0x1]
  %v1024 = vlaneseq
  %v1025 = vshrl.u32 %v1024, 7
  %v1026 = vsub.s32 0, %v1025
  %v1027 = vrot.slane %v1023, %v1026
  %v1028 = vadd.f32 %v945, %v1027
  %v1029 = vadd.f32 %v950, %v1027
  %v1030 = vadd.f32 %v955, %v1027
  %v1031 = vadd.f32 %v960, %v1027
  %v1032 = vadd.f32 %v965, %v1027
  %v1033 = vadd.f32 %v970, %v1027
  %v1034 = vadd.f32 %v975, %v1027
  %v1035 = vadd.f32 %v980, %v1027
  %v1036 = vadd.f32 %v985, %v1027
  %v1037 = vadd.f32 %v990, %v1027
  %v1038 = vadd.f32 %v995, %v1027
  %v1039 = vadd.f32 %v1000, %v1027
  %v1040 = vadd.f32 %v1005, %v1027
  %v1041 = vadd.f32 %v1010, %v1027
  %v1042 = vadd.f32 %v1015, %v1027
  %v1043 = vadd.f32 %v1020, %v1027
  %v1044 = vmax.f32 %v1028, 0.0
  %v1045 = vmax.f32 %v1029, 0.0
  %v1046 = vmax.f32 %v1030, 0.0
  %v1047 = vmax.f32 %v1031, 0.0
  %v1048 = vmax.f32 %v1032, 0.0
  %v1049 = vmax.f32 %v1033, 0.0
  %v1050 = vmax.f32 %v1034, 0.0
  %v1051 = vmax.f32 %v1035, 0.0
  %v1052 = vmax.f32 %v1036, 0.0
  %v1053 = vmax.f32 %v1037, 0.0
  %v1054 = vmax.f32 %v1038, 0.0
  %v1055 = vmax.f32 %v1039, 0.0
  %v1056 = vmax.f32 %v1040, 0.0
  %v1057 = vmax.f32 %v1041, 0.0
  %v1058 = vmax.f32 %v1042, 0.0
  %v1059 = vmax.f32 %v1043, 0.0
  %v1060 = vld [vmem:[%s6 + $0x2] sm:$0x1]
  %v1061 = vlaneseq
  %v1062 = vshrl.u32 %v1061, 7
  %v1063 = vsub.s32 0, %v1062
  %v1064 = vrot.slane %v1060, %v1063
  %1066 = vrot.lane.b32.xlu0 %v1064, 8
  %v1067 = vpop.permute.xlu0 %1066
  %v1069 = vadd.f32 %v945, %v1067
  %v1070 = vadd.f32 %v950, %v1067
  %v1071 = vadd.f32 %v955, %v1067
  %v1072 = vadd.f32 %v960, %v1067
  %v1073 = vadd.f32 %v965, %v1067
  %v1074 = vadd.f32 %v970, %v1067
  %v1075 = vadd.f32 %v975, %v1067
  %v1076 = vadd.f32 %v980, %v1067
  %v1077 = vadd.f32 %v985, %v1067
  %v1078 = vadd.f32 %v990, %v1067
  %v1079 = vadd.f32 %v995, %v1067
  %v1080 = vadd.f32 %v1000, %v1067
  %v1081 = vadd.f32 %v1005, %v1067
  %v1082 = vadd.f32 %v1010, %v1067
  %v1083 = vadd.f32 %v1015, %v1067
  %v1084 = vadd.f32 %v1020, %v1067
  %1085 = vst.msk [vmem:[#allocation2] sm:$0xff] %vm701, 0.0
  %vm1086 = vcmask 58368
  %1087 = vst.msk [vmem:[#allocation2 + $0x8] sm:$0x3] %vm1086, 0.0
  %1088 = vst.msk [vmem:[#allocation2 + $0xa0] sm:$0xff] %vm701, 0.0
  %1089 = vst.msk [vmem:[#allocation2 + $0xa8] sm:$0x3] %vm1086, 0.0
  %s1090 = scalar_lea.vmem [#allocation2], 144
  %1091 = vst.msk [vmem:[%s1090] sm:$0xff] %vm701, 0.0
  %1092 = vst.msk [vmem:[%s1090 + $0x8] sm:$0x3] %vm1086, 0.0
  %1093 = vst.msk [vmem:[%s1090 + $0xa0] sm:$0xff] %vm701, 0.0
  %1094 = vst.msk [vmem:[%s1090 + $0xa8] sm:$0x3] %vm1086, 0.0
  %vm1095 = vcmask 57344
  %1096 = vst.msk [vmem:[#allocation2] sm:$0x1] %vm1095, 0.0
  %1097 = vst.msk [vmem:[#allocation2 + $0x10] sm:$0x1] %vm1095, 0.0
  %1098 = vst.msk [vmem:[#allocation2 + $0x20] sm:$0x1] %vm1095, 0.0
  %1099 = vst.msk [vmem:[#allocation2 + $0x30] sm:$0x1] %vm1095, 0.0
  %1100 = vst.msk [vmem:[#allocation2 + $0x40] sm:$0x1] %vm1095, 0.0
  %1101 = vst.msk [vmem:[#allocation2 + $0x50] sm:$0x1] %vm1095, 0.0
  %1102 = vst.msk [vmem:[#allocation2 + $0x60] sm:$0x1] %vm1095, 0.0
  %1103 = vst.msk [vmem:[#allocation2 + $0x70] sm:$0x1] %vm1095, 0.0
  %1104 = vst.msk [vmem:[#allocation2 + $0x80] sm:$0x1] %vm1095, 0.0
  %1105 = vst.msk [vmem:[#allocation2 + $0x90] sm:$0x1] %vm1095, 0.0
  %1106 = vst.msk [vmem:[#allocation2 + $0xa0] sm:$0x1] %vm1095, 0.0
  %1107 = vst.msk [vmem:[#allocation2 + $0xb0] sm:$0x1] %vm1095, 0.0
  %1108 = vst.msk [vmem:[#allocation2 + $0xc0] sm:$0x1] %vm1095, 0.0
  %1109 = vst.msk [vmem:[#allocation2 + $0xd0] sm:$0x1] %vm1095, 0.0
  %1110 = vst.msk [vmem:[#allocation2 + $0xe0] sm:$0x1] %vm1095, 0.0
  %1111 = vst.msk [vmem:[#allocation2 + $0xf0] sm:$0x1] %vm1095, 0.0
  %1112 = vst.msk [vmem:[#allocation2 + $0x100] sm:$0x1] %vm1095, 0.0
  %1113 = vst.msk [vmem:[#allocation2 + $0x110] sm:$0x1] %vm1095, 0.0
  %1114 = vst.msk [vmem:[#allocation2 + $0x120] sm:$0x1] %vm1095, 0.0
  %1115 = vst.msk [vmem:[#allocation2 + $0x130] sm:$0x1] %vm1095, 0.0
  %1116 = vst.msk [vmem:[#allocation2 + $0x9] sm:$0x1] %vm1095, 0.0
  %1117 = vst.msk [vmem:[#allocation2 + $0x19] sm:$0x1] %vm1095, 0.0
  %1118 = vst.msk [vmem:[#allocation2 + $0x29] sm:$0x1] %vm1095, 0.0
  %1119 = vst.msk [vmem:[#allocation2 + $0x39] sm:$0x1] %vm1095, 0.0
  %1120 = vst.msk [vmem:[#allocation2 + $0x49] sm:$0x1] %vm1095, 0.0
  %1121 = vst.msk [vmem:[#allocation2 + $0x59] sm:$0x1] %vm1095, 0.0
  %1122 = vst.msk [vmem:[#allocation2 + $0x69] sm:$0x1] %vm1095, 0.0
  %1123 = vst.msk [vmem:[#allocation2 + $0x79] sm:$0x1] %vm1095, 0.0
  %1124 = vst.msk [vmem:[#allocation2 + $0x89] sm:$0x1] %vm1095, 0.0
  %1125 = vst.msk [vmem:[#allocation2 + $0x99] sm:$0x1] %vm1095, 0.0
  %1126 = vst.msk [vmem:[#allocation2 + $0xa9] sm:$0x1] %vm1095, 0.0
  %1127 = vst.msk [vmem:[#allocation2 + $0xb9] sm:$0x1] %vm1095, 0.0
  %1128 = vst.msk [vmem:[#allocation2 + $0xc9] sm:$0x1] %vm1095, 0.0
  %1129 = vst.msk [vmem:[#allocation2 + $0xd9] sm:$0x1] %vm1095, 0.0
  %1130 = vst.msk [vmem:[#allocation2 + $0xe9] sm:$0x1] %vm1095, 0.0
  %1131 = vst.msk [vmem:[#allocation2 + $0xf9] sm:$0x1] %vm1095, 0.0
  %1132 = vst.msk [vmem:[#allocation2 + $0x109] sm:$0x1] %vm1095, 0.0
  %1133 = vst.msk [vmem:[#allocation2 + $0x119] sm:$0x1] %vm1095, 0.0
  %1134 = vst.msk [vmem:[#allocation2 + $0x129] sm:$0x1] %vm1095, 0.0
  %1135 = vst.msk [vmem:[#allocation2 + $0x139] sm:$0x1] %vm1095, 0.0
  %s1136 = scalar_lea.vmem [#allocation2], 16
  %1137 = vst.msk [vmem:[%s1136 + $0x1] sm:$0xff] %vm701, %v1044
  %1138 = vst.msk [vmem:[%s1136 + $0x11] sm:$0xff] %vm701, %v1045
  %1139 = vst.msk [vmem:[%s1136 + $0x21] sm:$0xff] %vm701, %v1046
  %1140 = vst.msk [vmem:[%s1136 + $0x31] sm:$0xff] %vm701, %v1047
  %1141 = vst.msk [vmem:[%s1136 + $0x41] sm:$0xff] %vm701, %v1048
  %1142 = vst.msk [vmem:[%s1136 + $0x51] sm:$0xff] %vm701, %v1049
  %1143 = vst.msk [vmem:[%s1136 + $0x61] sm:$0xff] %vm701, %v1050
  %1144 = vst.msk [vmem:[%s1136 + $0x71] sm:$0xff] %vm701, %v1051
  %1145 = vst.msk [vmem:[%s1136 + $0xa1] sm:$0xff] %vm701, %v1052
  %1146 = vst.msk [vmem:[%s1136 + $0xb1] sm:$0xff] %vm701, %v1053
  %1147 = vst.msk [vmem:[%s1136 + $0xc1] sm:$0xff] %vm701, %v1054
  %1148 = vst.msk [vmem:[%s1136 + $0xd1] sm:$0xff] %vm701, %v1055
  %1149 = vst.msk [vmem:[%s1136 + $0xe1] sm:$0xff] %vm701, %v1056
  %1150 = vst.msk [vmem:[%s1136 + $0xf1] sm:$0xff] %vm701, %v1057
  %1151 = vst.msk [vmem:[%s1136 + $0x101] sm:$0xff] %vm701, %v1058
  %1152 = vst.msk [vmem:[%s1136 + $0x111] sm:$0xff] %vm701, %v1059
  %v1153 = vld [vmem:[#allocation2] sm:$0xff]
  %v1154 = vld [vmem:[#allocation2 + $0x10] sm:$0xff]
  %v1155 = vld [vmem:[#allocation2 + $0x20] sm:$0xff]
  %v1156 = vld [vmem:[#allocation2 + $0x30] sm:$0xff]
  %v1157 = vld [vmem:[#allocation2 + $0x40] sm:$0xff]
  %v1158 = vld [vmem:[#allocation2 + $0x50] sm:$0xff]
  %v1159 = vld [vmem:[#allocation2 + $0x60] sm:$0xff]
  %v1160 = vld [vmem:[#allocation2 + $0x70] sm:$0xff]
  %v1161 = vld [vmem:[#allocation2 + $0xa0] sm:$0xff]
  %v1162 = vld [vmem:[#allocation2 + $0xb0] sm:$0xff]
  %v1163 = vld [vmem:[#allocation2 + $0xc0] sm:$0xff]
  %v1164 = vld [vmem:[#allocation2 + $0xd0] sm:$0xff]
  %v1165 = vld [vmem:[#allocation2 + $0xe0] sm:$0xff]
  %v1166 = vld [vmem:[#allocation2 + $0xf0] sm:$0xff]
  %v1167 = vld [vmem:[#allocation2 + $0x100] sm:$0xff]
  %v1168 = vld [vmem:[#allocation2 + $0x110] sm:$0xff]
  %v1169 = vld [vmem:[#allocation2 + $0x1] sm:$0xff]
  %v1170 = vld [vmem:[#allocation2 + $0x11] sm:$0xff]
  %v1171 = vld [vmem:[#allocation2 + $0x21] sm:$0xff]
  %v1172 = vld [vmem:[#allocation2 + $0x31] sm:$0xff]
  %v1173 = vld [vmem:[#allocation2 + $0x41] sm:$0xff]
  %v1174 = vld [vmem:[#allocation2 + $0x51] sm:$0xff]
  %v1175 = vld [vmem:[#allocation2 + $0x61] sm:$0xff]
  %v1176 = vld [vmem:[#allocation2 + $0x71] sm:$0xff]
  %v1177 = vld [vmem:[#allocation2 + $0xa1] sm:$0xff]
  %v1178 = vld [vmem:[#allocation2 + $0xb1] sm:$0xff]
  %v1179 = vld [vmem:[#allocation2 + $0xc1] sm:$0xff]
  %v1180 = vld [vmem:[#allocation2 + $0xd1] sm:$0xff]
  %v1181 = vld [vmem:[#allocation2 + $0xe1] sm:$0xff]
  %v1182 = vld [vmem:[#allocation2 + $0xf1] sm:$0xff]
  %v1183 = vld [vmem:[#allocation2 + $0x101] sm:$0xff]
  %v1184 = vld [vmem:[#allocation2 + $0x111] sm:$0xff]
  %v1185 = vld [vmem:[#allocation2 + $0x2] sm:$0xff]
  %v1186 = vld [vmem:[#allocation2 + $0x12] sm:$0xff]
  %v1187 = vld [vmem:[#allocation2 + $0x22] sm:$0xff]
  %v1188 = vld [vmem:[#allocation2 + $0x32] sm:$0xff]
  %v1189 = vld [vmem:[#allocation2 + $0x42] sm:$0xff]
  %v1190 = vld [vmem:[#allocation2 + $0x52] sm:$0xff]
  %v1191 = vld [vmem:[#allocation2 + $0x62] sm:$0xff]
  %v1192 = vld [vmem:[#allocation2 + $0x72] sm:$0xff]
  %v1193 = vld [vmem:[#allocation2 + $0xa2] sm:$0xff]
  %v1194 = vld [vmem:[#allocation2 + $0xb2] sm:$0xff]
  %v1195 = vld [vmem:[#allocation2 + $0xc2] sm:$0xff]
  %v1196 = vld [vmem:[#allocation2 + $0xd2] sm:$0xff]
  %v1197 = vld [vmem:[#allocation2 + $0xe2] sm:$0xff]
  %v1198 = vld [vmem:[#allocation2 + $0xf2] sm:$0xff]
  %v1199 = vld [vmem:[#allocation2 + $0x102] sm:$0xff]
  %v1200 = vld [vmem:[#allocation2 + $0x112] sm:$0xff]
  %v1201 = vld [vmem:[%s1136] sm:$0xff]
  %v1202 = vld [vmem:[%s1136 + $0x10] sm:$0xff]
  %v1203 = vld [vmem:[%s1136 + $0x20] sm:$0xff]
  %v1204 = vld [vmem:[%s1136 + $0x30] sm:$0xff]
  %v1205 = vld [vmem:[%s1136 + $0x40] sm:$0xff]
  %v1206 = vld [vmem:[%s1136 + $0x50] sm:$0xff]
  %v1207 = vld [vmem:[%s1136 + $0x60] sm:$0xff]
  %v1208 = vld [vmem:[%s1136 + $0x70] sm:$0xff]
  %v1209 = vld [vmem:[%s1136 + $0xa0] sm:$0xff]
  %v1210 = vld [vmem:[%s1136 + $0xb0] sm:$0xff]
  %v1211 = vld [vmem:[%s1136 + $0xc0] sm:$0xff]
  %v1212 = vld [vmem:[%s1136 + $0xd0] sm:$0xff]
  %v1213 = vld [vmem:[%s1136 + $0xe0] sm:$0xff]
  %v1214 = vld [vmem:[%s1136 + $0xf0] sm:$0xff]
  %v1215 = vld [vmem:[%s1136 + $0x100] sm:$0xff]
  %v1216 = vld [vmem:[%s1136 + $0x110] sm:$0xff]
  %v1217 = vld [vmem:[%s1136 + $0x1] sm:$0xff]
  %v1218 = vld [vmem:[%s1136 + $0x11] sm:$0xff]
  %v1219 = vld [vmem:[%s1136 + $0x21] sm:$0xff]
  %v1220 = vld [vmem:[%s1136 + $0x31] sm:$0xff]
  %v1221 = vld [vmem:[%s1136 + $0x41] sm:$0xff]
  %v1222 = vld [vmem:[%s1136 + $0x51] sm:$0xff]
  %v1223 = vld [vmem:[%s1136 + $0x61] sm:$0xff]
  %v1224 = vld [vmem:[%s1136 + $0x71] sm:$0xff]
  %v1225 = vld [vmem:[%s1136 + $0xa1] sm:$0xff]
  %v1226 = vld [vmem:[%s1136 + $0xb1] sm:$0xff]
  %v1227 = vld [vmem:[%s1136 + $0xc1] sm:$0xff]
  %v1228 = vld [vmem:[%s1136 + $0xd1] sm:$0xff]
  %v1229 = vld [vmem:[%s1136 + $0xe1] sm:$0xff]
  %v1230 = vld [vmem:[%s1136 + $0xf1] sm:$0xff]
  %v1231 = vld [vmem:[%s1136 + $0x101] sm:$0xff]
  %v1232 = vld [vmem:[%s1136 + $0x111] sm:$0xff]
  %v1233 = vld [vmem:[%s1136 + $0x2] sm:$0xff]
  %v1234 = vld [vmem:[%s1136 + $0x12] sm:$0xff]
  %v1235 = vld [vmem:[%s1136 + $0x22] sm:$0xff]
  %v1236 = vld [vmem:[%s1136 + $0x32] sm:$0xff]
  %v1237 = vld [vmem:[%s1136 + $0x42] sm:$0xff]
  %v1238 = vld [vmem:[%s1136 + $0x52] sm:$0xff]
  %v1239 = vld [vmem:[%s1136 + $0x62] sm:$0xff]
  %v1240 = vld [vmem:[%s1136 + $0x72] sm:$0xff]
  %v1241 = vld [vmem:[%s1136 + $0xa2] sm:$0xff]
  %v1242 = vld [vmem:[%s1136 + $0xb2] sm:$0xff]
  %v1243 = vld [vmem:[%s1136 + $0xc2] sm:$0xff]
  %v1244 = vld [vmem:[%s1136 + $0xd2] sm:$0xff]
  %v1245 = vld [vmem:[%s1136 + $0xe2] sm:$0xff]
  %v1246 = vld [vmem:[%s1136 + $0xf2] sm:$0xff]
  %v1247 = vld [vmem:[%s1136 + $0x102] sm:$0xff]
  %v1248 = vld [vmem:[%s1136 + $0x112] sm:$0xff]
  %s1249 = scalar_lea.vmem [#allocation2], 32
  %v1250 = vld [vmem:[%s1249] sm:$0xff]
  %v1251 = vld [vmem:[%s1249 + $0x10] sm:$0xff]
  %v1252 = vld [vmem:[%s1249 + $0x20] sm:$0xff]
  %v1253 = vld [vmem:[%s1249 + $0x30] sm:$0xff]
  %v1254 = vld [vmem:[%s1249 + $0x40] sm:$0xff]
  %v1255 = vld [vmem:[%s1249 + $0x50] sm:$0xff]
  %v1256 = vld [vmem:[%s1249 + $0x60] sm:$0xff]
  %v1257 = vld [vmem:[%s1249 + $0x70] sm:$0xff]
  %v1258 = vld [vmem:[%s1249 + $0xa0] sm:$0xff]
  %v1259 = vld [vmem:[%s1249 + $0xb0] sm:$0xff]
  %v1260 = vld [vmem:[%s1249 + $0xc0] sm:$0xff]
  %v1261 = vld [vmem:[%s1249 + $0xd0] sm:$0xff]
  %v1262 = vld [vmem:[%s1249 + $0xe0] sm:$0xff]
  %v1263 = vld [vmem:[%s1249 + $0xf0] sm:$0xff]
  %v1264 = vld [vmem:[%s1249 + $0x100] sm:$0xff]
  %v1265 = vld [vmem:[%s1249 + $0x110] sm:$0xff]
  %v1266 = vld [vmem:[%s1249 + $0x1] sm:$0xff]
  %v1267 = vld [vmem:[%s1249 + $0x11] sm:$0xff]
  %v1268 = vld [vmem:[%s1249 + $0x21] sm:$0xff]
  %v1269 = vld [vmem:[%s1249 + $0x31] sm:$0xff]
  %v1270 = vld [vmem:[%s1249 + $0x41] sm:$0xff]
  %v1271 = vld [vmem:[%s1249 + $0x51] sm:$0xff]
  %v1272 = vld [vmem:[%s1249 + $0x61] sm:$0xff]
  %v1273 = vld [vmem:[%s1249 + $0x71] sm:$0xff]
  %v1274 = vld [vmem:[%s1249 + $0xa1] sm:$0xff]
  %v1275 = vld [vmem:[%s1249 + $0xb1] sm:$0xff]
  %v1276 = vld [vmem:[%s1249 + $0xc1] sm:$0xff]
  %v1277 = vld [vmem:[%s1249 + $0xd1] sm:$0xff]
  %v1278 = vld [vmem:[%s1249 + $0xe1] sm:$0xff]
  %v1279 = vld [vmem:[%s1249 + $0xf1] sm:$0xff]
  %v1280 = vld [vmem:[%s1249 + $0x101] sm:$0xff]
  %v1281 = vld [vmem:[%s1249 + $0x111] sm:$0xff]
  %v1282 = vld [vmem:[%s1249 + $0x2] sm:$0xff]
  %v1283 = vld [vmem:[%s1249 + $0x12] sm:$0xff]
  %v1284 = vld [vmem:[%s1249 + $0x22] sm:$0xff]
  %v1285 = vld [vmem:[%s1249 + $0x32] sm:$0xff]
  %v1286 = vld [vmem:[%s1249 + $0x42] sm:$0xff]
  %v1287 = vld [vmem:[%s1249 + $0x52] sm:$0xff]
  %v1288 = vld [vmem:[%s1249 + $0x62] sm:$0xff]
  %v1289 = vld [vmem:[%s1249 + $0x72] sm:$0xff]
  %v1290 = vld [vmem:[%s1249 + $0xa2] sm:$0xff]
  %v1291 = vld [vmem:[%s1249 + $0xb2] sm:$0xff]
  %v1292 = vld [vmem:[%s1249 + $0xc2] sm:$0xff]
  %v1293 = vld [vmem:[%s1249 + $0xd2] sm:$0xff]
  %v1294 = vld [vmem:[%s1249 + $0xe2] sm:$0xff]
  %v1295 = vld [vmem:[%s1249 + $0xf2] sm:$0xff]
  %v1296 = vld [vmem:[%s1249 + $0x102] sm:$0xff]
  %v1297 = vld [vmem:[%s1249 + $0x112] sm:$0xff]
  %1314 = vrot.lane.b32.xlu0 %v1169, 8
  %v1315 = vpop.permute.xlu0 %1314
  %1316 = vrot.lane.b32.xlu0 %v1170, 8
  %v1317 = vpop.permute.xlu0 %1316
  %1318 = vrot.lane.b32.xlu0 %v1171, 8
  %v1319 = vpop.permute.xlu0 %1318
  %1320 = vrot.lane.b32.xlu0 %v1172, 8
  %v1321 = vpop.permute.xlu0 %1320
  %1322 = vrot.lane.b32.xlu0 %v1173, 8
  %v1323 = vpop.permute.xlu0 %1322
  %1324 = vrot.lane.b32.xlu0 %v1174, 8
  %v1325 = vpop.permute.xlu0 %1324
  %1326 = vrot.lane.b32.xlu0 %v1175, 8
  %v1327 = vpop.permute.xlu0 %1326
  %1328 = vrot.lane.b32.xlu0 %v1176, 8
  %v1329 = vpop.permute.xlu0 %1328
  %1330 = vrot.lane.b32.xlu0 %v1177, 8
  %v1331 = vpop.permute.xlu0 %1330
  %1332 = vrot.lane.b32.xlu0 %v1178, 8
  %v1333 = vpop.permute.xlu0 %1332
  %1334 = vrot.lane.b32.xlu0 %v1179, 8
  %v1335 = vpop.permute.xlu0 %1334
  %1336 = vrot.lane.b32.xlu0 %v1180, 8
  %v1337 = vpop.permute.xlu0 %1336
  %1338 = vrot.lane.b32.xlu0 %v1181, 8
  %v1339 = vpop.permute.xlu0 %1338
  %1340 = vrot.lane.b32.xlu0 %v1182, 8
  %v1341 = vpop.permute.xlu0 %1340
  %1342 = vrot.lane.b32.xlu0 %v1183, 8
  %v1343 = vpop.permute.xlu0 %1342
  %1344 = vrot.lane.b32.xlu0 %v1184, 8
  %v1345 = vpop.permute.xlu0 %1344
  %1378 = vrot.lane.b32.xlu0 %v1185, 16
  %v1379 = vpop.permute.xlu0 %1378
  %1380 = vrot.lane.b32.xlu0 %v1186, 16
  %v1381 = vpop.permute.xlu0 %1380
  %1382 = vrot.lane.b32.xlu0 %v1187, 16
  %v1383 = vpop.permute.xlu0 %1382
  %1384 = vrot.lane.b32.xlu0 %v1188, 16
  %v1385 = vpop.permute.xlu0 %1384
  %1386 = vrot.lane.b32.xlu0 %v1189, 16
  %v1387 = vpop.permute.xlu0 %1386
  %1388 = vrot.lane.b32.xlu0 %v1190, 16
  %v1389 = vpop.permute.xlu0 %1388
  %1390 = vrot.lane.b32.xlu0 %v1191, 16
  %v1391 = vpop.permute.xlu0 %1390
  %1392 = vrot.lane.b32.xlu0 %v1192, 16
  %v1393 = vpop.permute.xlu0 %1392
  %1394 = vrot.lane.b32.xlu0 %v1193, 16
  %v1395 = vpop.permute.xlu0 %1394
  %1396 = vrot.lane.b32.xlu0 %v1194, 16
  %v1397 = vpop.permute.xlu0 %1396
  %1398 = vrot.lane.b32.xlu0 %v1195, 16
  %v1399 = vpop.permute.xlu0 %1398
  %1400 = vrot.lane.b32.xlu0 %v1196, 16
  %v1401 = vpop.permute.xlu0 %1400
  %1402 = vrot.lane.b32.xlu0 %v1197, 16
  %v1403 = vpop.permute.xlu0 %1402
  %1404 = vrot.lane.b32.xlu0 %v1198, 16
  %v1405 = vpop.permute.xlu0 %1404
  %1406 = vrot.lane.b32.xlu0 %v1199, 16
  %v1407 = vpop.permute.xlu0 %1406
  %1408 = vrot.lane.b32.xlu0 %v1200, 16
  %v1409 = vpop.permute.xlu0 %1408
  %1442 = vrot.lane.b32.xlu0 %v1201, 24
  %v1443 = vpop.permute.xlu0 %1442
  %1444 = vrot.lane.b32.xlu0 %v1202, 24
  %v1445 = vpop.permute.xlu0 %1444
  %1446 = vrot.lane.b32.xlu0 %v1203, 24
  %v1447 = vpop.permute.xlu0 %1446
  %1448 = vrot.lane.b32.xlu0 %v1204, 24
  %v1449 = vpop.permute.xlu0 %1448
  %1450 = vrot.lane.b32.xlu0 %v1205, 24
  %v1451 = vpop.permute.xlu0 %1450
  %1452 = vrot.lane.b32.xlu0 %v1206, 24
  %v1453 = vpop.permute.xlu0 %1452
  %1454 = vrot.lane.b32.xlu0 %v1207, 24
  %v1455 = vpop.permute.xlu0 %1454
  %1456 = vrot.lane.b32.xlu0 %v1208, 24
  %v1457 = vpop.permute.xlu0 %1456
  %1458 = vrot.lane.b32.xlu0 %v1209, 24
  %v1459 = vpop.permute.xlu0 %1458
  %1460 = vrot.lane.b32.xlu0 %v1210, 24
  %v1461 = vpop.permute.xlu0 %1460
  %1462 = vrot.lane.b32.xlu0 %v1211, 24
  %v1463 = vpop.permute.xlu0 %1462
  %1464 = vrot.lane.b32.xlu0 %v1212, 24
  %v1465 = vpop.permute.xlu0 %1464
  %1466 = vrot.lane.b32.xlu0 %v1213, 24
  %v1467 = vpop.permute.xlu0 %1466
  %1468 = vrot.lane.b32.xlu0 %v1214, 24
  %v1469 = vpop.permute.xlu0 %1468
  %1470 = vrot.lane.b32.xlu0 %v1215, 24
  %v1471 = vpop.permute.xlu0 %1470
  %1472 = vrot.lane.b32.xlu0 %v1216, 24
  %v1473 = vpop.permute.xlu0 %1472
  %1506 = vrot.lane.b32.xlu0 %v1217, 32
  %v1507 = vpop.permute.xlu0 %1506
  %1508 = vrot.lane.b32.xlu0 %v1218, 32
  %v1509 = vpop.permute.xlu0 %1508
  %1510 = vrot.lane.b32.xlu0 %v1219, 32
  %v1511 = vpop.permute.xlu0 %1510
  %1512 = vrot.lane.b32.xlu0 %v1220, 32
  %v1513 = vpop.permute.xlu0 %1512
  %1514 = vrot.lane.b32.xlu0 %v1221, 32
  %v1515 = vpop.permute.xlu0 %1514
  %1516 = vrot.lane.b32.xlu0 %v1222, 32
  %v1517 = vpop.permute.xlu0 %1516
  %1518 = vrot.lane.b32.xlu0 %v1223, 32
  %v1519 = vpop.permute.xlu0 %1518
  %1520 = vrot.lane.b32.xlu0 %v1224, 32
  %v1521 = vpop.permute.xlu0 %1520
  %1522 = vrot.lane.b32.xlu0 %v1225, 32
  %v1523 = vpop.permute.xlu0 %1522
  %1524 = vrot.lane.b32.xlu0 %v1226, 32
  %v1525 = vpop.permute.xlu0 %1524
  %1526 = vrot.lane.b32.xlu0 %v1227, 32
  %v1527 = vpop.permute.xlu0 %1526
  %1528 = vrot.lane.b32.xlu0 %v1228, 32
  %v1529 = vpop.permute.xlu0 %1528
  %1530 = vrot.lane.b32.xlu0 %v1229, 32
  %v1531 = vpop.permute.xlu0 %1530
  %1532 = vrot.lane.b32.xlu0 %v1230, 32
  %v1533 = vpop.permute.xlu0 %1532
  %1534 = vrot.lane.b32.xlu0 %v1231, 32
  %v1535 = vpop.permute.xlu0 %1534
  %1536 = vrot.lane.b32.xlu0 %v1232, 32
  %v1537 = vpop.permute.xlu0 %1536
  %1570 = vrot.lane.b32.xlu0 %v1233, 40
  %v1571 = vpop.permute.xlu0 %1570
  %1572 = vrot.lane.b32.xlu0 %v1234, 40
  %v1573 = vpop.permute.xlu0 %1572
  %1574 = vrot.lane.b32.xlu0 %v1235, 40
  %v1575 = vpop.permute.xlu0 %1574
  %1576 = vrot.lane.b32.xlu0 %v1236, 40
  %v1577 = vpop.permute.xlu0 %1576
  %1578 = vrot.lane.b32.xlu0 %v1237, 40
  %v1579 = vpop.permute.xlu0 %1578
  %1580 = vrot.lane.b32.xlu0 %v1238, 40
  %v1581 = vpop.permute.xlu0 %1580
  %1582 = vrot.lane.b32.xlu0 %v1239, 40
  %v1583 = vpop.permute.xlu0 %1582
  %1584 = vrot.lane.b32.xlu0 %v1240, 40
  %v1585 = vpop.permute.xlu0 %1584
  %1586 = vrot.lane.b32.xlu0 %v1241, 40
  %v1587 = vpop.permute.xlu0 %1586
  %1588 = vrot.lane.b32.xlu0 %v1242, 40
  %v1589 = vpop.permute.xlu0 %1588
  %1590 = vrot.lane.b32.xlu0 %v1243, 40
  %v1591 = vpop.permute.xlu0 %1590
  %1592 = vrot.lane.b32.xlu0 %v1244, 40
  %v1593 = vpop.permute.xlu0 %1592
  %1594 = vrot.lane.b32.xlu0 %v1245, 40
  %v1595 = vpop.permute.xlu0 %1594
  %1596 = vrot.lane.b32.xlu0 %v1246, 40
  %v1597 = vpop.permute.xlu0 %1596
  %1598 = vrot.lane.b32.xlu0 %v1247, 40
  %v1599 = vpop.permute.xlu0 %1598
  %1600 = vrot.lane.b32.xlu0 %v1248, 40
  %v1601 = vpop.permute.xlu0 %1600
  %1634 = vrot.lane.b32.xlu0 %v1250, 48
  %v1635 = vpop.permute.xlu0 %1634
  %1636 = vrot.lane.b32.xlu0 %v1251, 48
  %v1637 = vpop.permute.xlu0 %1636
  %1638 = vrot.lane.b32.xlu0 %v1252, 48
  %v1639 = vpop.permute.xlu0 %1638
  %1640 = vrot.lane.b32.xlu0 %v1253, 48
  %v1641 = vpop.permute.xlu0 %1640
  %1642 = vrot.lane.b32.xlu0 %v1254, 48
  %v1643 = vpop.permute.xlu0 %1642
  %1644 = vrot.lane.b32.xlu0 %v1255, 48
  %v1645 = vpop.permute.xlu0 %1644
  %1646 = vrot.lane.b32.xlu0 %v1256, 48
  %v1647 = vpop.permute.xlu0 %1646
  %1648 = vrot.lane.b32.xlu0 %v1257, 48
  %v1649 = vpop.permute.xlu0 %1648
  %1650 = vrot.lane.b32.xlu0 %v1258, 48
  %v1651 = vpop.permute.xlu0 %1650
  %1652 = vrot.lane.b32.xlu0 %v1259, 48
  %v1653 = vpop.permute.xlu0 %1652
  %1654 = vrot.lane.b32.xlu0 %v1260, 48
  %v1655 = vpop.permute.xlu0 %1654
  %1656 = vrot.lane.b32.xlu0 %v1261, 48
  %v1657 = vpop.permute.xlu0 %1656
  %1658 = vrot.lane.b32.xlu0 %v1262, 48
  %v1659 = vpop.permute.xlu0 %1658
  %1660 = vrot.lane.b32.xlu0 %v1263, 48
  %v1661 = vpop.permute.xlu0 %1660
  %1662 = vrot.lane.b32.xlu0 %v1264, 48
  %v1663 = vpop.permute.xlu0 %1662
  %1664 = vrot.lane.b32.xlu0 %v1265, 48
  %v1665 = vpop.permute.xlu0 %1664
  %1698 = vrot.lane.b32.xlu0 %v1266, 56
  %v1699 = vpop.permute.xlu0 %1698
  %1700 = vrot.lane.b32.xlu0 %v1267, 56
  %v1701 = vpop.permute.xlu0 %1700
  %1702 = vrot.lane.b32.xlu0 %v1268, 56
  %v1703 = vpop.permute.xlu0 %1702
  %1704 = vrot.lane.b32.xlu0 %v1269, 56
  %v1705 = vpop.permute.xlu0 %1704
  %1706 = vrot.lane.b32.xlu0 %v1270, 56
  %v1707 = vpop.permute.xlu0 %1706
  %1708 = vrot.lane.b32.xlu0 %v1271, 56
  %v1709 = vpop.permute.xlu0 %1708
  %1710 = vrot.lane.b32.xlu0 %v1272, 56
  %v1711 = vpop.permute.xlu0 %1710
  %1712 = vrot.lane.b32.xlu0 %v1273, 56
  %v1713 = vpop.permute.xlu0 %1712
  %1714 = vrot.lane.b32.xlu0 %v1274, 56
  %v1715 = vpop.permute.xlu0 %1714
  %1716 = vrot.lane.b32.xlu0 %v1275, 56
  %v1717 = vpop.permute.xlu0 %1716
  %1718 = vrot.lane.b32.xlu0 %v1276, 56
  %v1719 = vpop.permute.xlu0 %1718
  %1720 = vrot.lane.b32.xlu0 %v1277, 56
  %v1721 = vpop.permute.xlu0 %1720
  %1722 = vrot.lane.b32.xlu0 %v1278, 56
  %v1723 = vpop.permute.xlu0 %1722
  %1724 = vrot.lane.b32.xlu0 %v1279, 56
  %v1725 = vpop.permute.xlu0 %1724
  %1726 = vrot.lane.b32.xlu0 %v1280, 56
  %v1727 = vpop.permute.xlu0 %1726
  %1728 = vrot.lane.b32.xlu0 %v1281, 56
  %v1729 = vpop.permute.xlu0 %1728
  %1762 = vrot.lane.b32.xlu0 %v1282, 64
  %v1763 = vpop.permute.xlu0 %1762
  %1764 = vrot.lane.b32.xlu0 %v1283, 64
  %v1765 = vpop.permute.xlu0 %1764
  %1766 = vrot.lane.b32.xlu0 %v1284, 64
  %v1767 = vpop.permute.xlu0 %1766
  %1768 = vrot.lane.b32.xlu0 %v1285, 64
  %v1769 = vpop.permute.xlu0 %1768
  %1770 = vrot.lane.b32.xlu0 %v1286, 64
  %v1771 = vpop.permute.xlu0 %1770
  %1772 = vrot.lane.b32.xlu0 %v1287, 64
  %v1773 = vpop.permute.xlu0 %1772
  %1774 = vrot.lane.b32.xlu0 %v1288, 64
  %v1775 = vpop.permute.xlu0 %1774
  %1776 = vrot.lane.b32.xlu0 %v1289, 64
  %v1777 = vpop.permute.xlu0 %1776
  %1778 = vrot.lane.b32.xlu0 %v1290, 64
  %v1779 = vpop.permute.xlu0 %1778
  %1780 = vrot.lane.b32.xlu0 %v1291, 64
  %v1781 = vpop.permute.xlu0 %1780
  %1782 = vrot.lane.b32.xlu0 %v1292, 64
  %v1783 = vpop.permute.xlu0 %1782
  %1784 = vrot.lane.b32.xlu0 %v1293, 64
  %v1785 = vpop.permute.xlu0 %1784
  %1786 = vrot.lane.b32.xlu0 %v1294, 64
  %v1787 = vpop.permute.xlu0 %1786
  %1788 = vrot.lane.b32.xlu0 %v1295, 64
  %v1789 = vpop.permute.xlu0 %1788
  %1790 = vrot.lane.b32.xlu0 %v1296, 64
  %v1791 = vpop.permute.xlu0 %1790
  %1792 = vrot.lane.b32.xlu0 %v1297, 64
  %v1793 = vpop.permute.xlu0 %1792
  %v1810 = vsel %vm701, %v1153, %v1315
  %v1811 = vsel %vm701, %v1154, %v1317
  %v1812 = vsel %vm701, %v1155, %v1319
  %v1813 = vsel %vm701, %v1156, %v1321
  %v1814 = vsel %vm701, %v1157, %v1323
  %v1815 = vsel %vm701, %v1158, %v1325
  %v1816 = vsel %vm701, %v1159, %v1327
  %v1817 = vsel %vm701, %v1160, %v1329
  %v1818 = vsel %vm701, %v1161, %v1331
  %v1819 = vsel %vm701, %v1162, %v1333
  %v1820 = vsel %vm701, %v1163, %v1335
  %v1821 = vsel %vm701, %v1164, %v1337
  %v1822 = vsel %vm701, %v1165, %v1339
  %v1823 = vsel %vm701, %v1166, %v1341
  %v1824 = vsel %vm701, %v1167, %v1343
  %v1825 = vsel %vm701, %v1168, %v1345
  %v1826 = vsel %vm735, %v1810, %v1379
  %v1827 = vsel %vm735, %v1811, %v1381
  %v1828 = vsel %vm735, %v1812, %v1383
  %v1829 = vsel %vm735, %v1813, %v1385
  %v1830 = vsel %vm735, %v1814, %v1387
  %v1831 = vsel %vm735, %v1815, %v1389
  %v1832 = vsel %vm735, %v1816, %v1391
  %v1833 = vsel %vm735, %v1817, %v1393
  %v1834 = vsel %vm735, %v1818, %v1395
  %v1835 = vsel %vm735, %v1819, %v1397
  %v1836 = vsel %vm735, %v1820, %v1399
  %v1837 = vsel %vm735, %v1821, %v1401
  %v1838 = vsel %vm735, %v1822, %v1403
  %v1839 = vsel %vm735, %v1823, %v1405
  %v1840 = vsel %vm735, %v1824, %v1407
  %v1841 = vsel %vm735, %v1825, %v1409
  %v1842 = vsel %vm769, %v1826, %v1443
  %v1843 = vsel %vm769, %v1827, %v1445
  %v1844 = vsel %vm769, %v1828, %v1447
  %v1845 = vsel %vm769, %v1829, %v1449
  %v1846 = vsel %vm769, %v1830, %v1451
  %v1847 = vsel %vm769, %v1831, %v1453
  %v1848 = vsel %vm769, %v1832, %v1455
  %v1849 = vsel %vm769, %v1833, %v1457
  %v1850 = vsel %vm769, %v1834, %v1459
  %v1851 = vsel %vm769, %v1835, %v1461
  %v1852 = vsel %vm769, %v1836, %v1463
  %v1853 = vsel %vm769, %v1837, %v1465
  %v1854 = vsel %vm769, %v1838, %v1467
  %v1855 = vsel %vm769, %v1839, %v1469
  %v1856 = vsel %vm769, %v1840, %v1471
  %v1857 = vsel %vm769, %v1841, %v1473
  %v1858 = vsel %vm803, %v1842, %v1507
  %v1859 = vsel %vm803, %v1843, %v1509
  %v1860 = vsel %vm803, %v1844, %v1511
  %v1861 = vsel %vm803, %v1845, %v1513
  %v1862 = vsel %vm803, %v1846, %v1515
  %v1863 = vsel %vm803, %v1847, %v1517
  %v1864 = vsel %vm803, %v1848, %v1519
  %v1865 = vsel %vm803, %v1849, %v1521
  %v1866 = vsel %vm803, %v1850, %v1523
  %v1867 = vsel %vm803, %v1851, %v1525
  %v1868 = vsel %vm803, %v1852, %v1527
  %v1869 = vsel %vm803, %v1853, %v1529
  %v1870 = vsel %vm803, %v1854, %v1531
  %v1871 = vsel %vm803, %v1855, %v1533
  %v1872 = vsel %vm803, %v1856, %v1535
  %v1873 = vsel %vm803, %v1857, %v1537
  %vm1874 = vcmask 326656
  %v1875 = vsel %vm1874, %v1858, %v1571
  %v1876 = vsel %vm1874, %v1859, %v1573
  %v1877 = vsel %vm1874, %v1860, %v1575
  %v1878 = vsel %vm1874, %v1861, %v1577
  %v1879 = vsel %vm1874, %v1862, %v1579
  %v1880 = vsel %vm1874, %v1863, %v1581
  %v1881 = vsel %vm1874, %v1864, %v1583
  %v1882 = vsel %vm1874, %v1865, %v1585
  %v1883 = vsel %vm1874, %v1866, %v1587
  %v1884 = vsel %vm1874, %v1867, %v1589
  %v1885 = vsel %vm1874, %v1868, %v1591
  %v1886 = vsel %vm1874, %v1869, %v1593
  %v1887 = vsel %vm1874, %v1870, %v1595
  %v1888 = vsel %vm1874, %v1871, %v1597
  %v1889 = vsel %vm1874, %v1872, %v1599
  %v1890 = vsel %vm1874, %v1873, %v1601
  %vm1891 = vcmask 392192
  %v1892 = vsel %vm1891, %v1875, %v1635
  %v1893 = vsel %vm1891, %v1876, %v1637
  %v1894 = vsel %vm1891, %v1877, %v1639
  %v1895 = vsel %vm1891, %v1878, %v1641
  %v1896 = vsel %vm1891, %v1879, %v1643
  %v1897 = vsel %vm1891, %v1880, %v1645
  %v1898 = vsel %vm1891, %v1881, %v1647
  %v1899 = vsel %vm1891, %v1882, %v1649
  %v1900 = vsel %vm1891, %v1883, %v1651
  %v1901 = vsel %vm1891, %v1884, %v1653
  %v1902 = vsel %vm1891, %v1885, %v1655
  %v1903 = vsel %vm1891, %v1886, %v1657
  %v1904 = vsel %vm1891, %v1887, %v1659
  %v1905 = vsel %vm1891, %v1888, %v1661
  %v1906 = vsel %vm1891, %v1889, %v1663
  %v1907 = vsel %vm1891, %v1890, %v1665
  %vm1908 = vcmask 457728
  %v1909 = vsel %vm1908, %v1892, %v1699
  %v1910 = vsel %vm1908, %v1893, %v1701
  %v1911 = vsel %vm1908, %v1894, %v1703
  %v1912 = vsel %vm1908, %v1895, %v1705
  %v1913 = vsel %vm1908, %v1896, %v1707
  %v1914 = vsel %vm1908, %v1897, %v1709
  %v1915 = vsel %vm1908, %v1898, %v1711
  %v1916 = vsel %vm1908, %v1899, %v1713
  %v1917 = vsel %vm1908, %v1900, %v1715
  %v1918 = vsel %vm1908, %v1901, %v1717
  %v1919 = vsel %vm1908, %v1902, %v1719
  %v1920 = vsel %vm1908, %v1903, %v1721
  %v1921 = vsel %vm1908, %v1904, %v1723
  %v1922 = vsel %vm1908, %v1905, %v1725
  %v1923 = vsel %vm1908, %v1906, %v1727
  %v1924 = vsel %vm1908, %v1907, %v1729
  %vm1925 = vcmask 523264
  %v1926 = vsel %vm1925, %v1909, %v1763
  %v1927 = vsel %vm1925, %v1910, %v1765
  %v1928 = vsel %vm1925, %v1911, %v1767
  %v1929 = vsel %vm1925, %v1912, %v1769
  %v1930 = vsel %vm1925, %v1913, %v1771
  %v1931 = vsel %vm1925, %v1914, %v1773
  %v1932 = vsel %vm1925, %v1915, %v1775
  %v1933 = vsel %vm1925, %v1916, %v1777
  %v1934 = vsel %vm1925, %v1917, %v1779
  %v1935 = vsel %vm1925, %v1918, %v1781
  %v1936 = vsel %vm1925, %v1919, %v1783
  %v1937 = vsel %vm1925, %v1920, %v1785
  %v1938 = vsel %vm1925, %v1921, %v1787
  %v1939 = vsel %vm1925, %v1922, %v1789
  %v1940 = vsel %vm1925, %v1923, %v1791
  %v1941 = vsel %vm1925, %v1924, %v1793
  %v1942 = vld [vmem:[%s5] sm:$0xff]
  %v1943 = vld [vmem:[%s5 + $0x8] sm:$0xff]
  %v1944 = vld [vmem:[%s5 + $0x10] sm:$0xff]
  %v1945 = vld [vmem:[%s5 + $0x18] sm:$0xff]
  %v1946 = vld [vmem:[%s5 + $0x20] sm:$0xff]
  %v1947 = vld [vmem:[%s5 + $0x28] sm:$0xff]
  %v1948 = vld [vmem:[%s5 + $0x30] sm:$0xff]
  %v1949 = vld [vmem:[%s5 + $0x38] sm:$0xff]
  %v1950 = vld [vmem:[%s5 + $0x40] sm:$0xff]
  %v1951 = vld [vmem:[%s6 + $0x1] sm:$0x1]
  %v1952 = vlaneseq
  %v1953 = vshrl.u32 %v1952, 7
  %v1954 = vsub.s32 0, %v1953
  %v1955 = vrot.slane %v1951, %v1954
  %vm1956 = vcmask 588800
  %v1958 = vsel %vm1956, %v1926, 0
  %v1961 = vsel %vm1956, %v1927, 0
  %v1964 = vsel %vm1956, %v1928, 0
  %v1967 = vsel %vm1956, %v1929, 0
  %v1970 = vsel %vm1956, %v1930, 0
  %v1973 = vsel %vm1956, %v1931, 0
  %v1976 = vsel %vm1956, %v1932, 0
  %v1979 = vsel %vm1956, %v1933, 0
  %v1982 = vsel %vm1956, %v1934, 0
  %v1985 = vsel %vm1956, %v1935, 0
  %v1988 = vsel %vm1956, %v1936, 0
  %v1991 = vsel %vm1956, %v1937, 0
  %v1994 = vsel %vm1956, %v1938, 0
  %v1997 = vsel %vm1956, %v1939, 0
  %v2000 = vsel %vm1956, %v1940, 0
  %v2003 = vsel %vm1956, %v1941, 0
  %2005 = vmatprep.subr.mxu0 0.0
  %2006 = vmatpush1.msra.mxu0 0.0
  %2007 = vmatprep.subr.mxu0 0.0
  %2008 = vmatpush1.msra.mxu0 0.0
  %2009 = vmatprep.subr.mxu0 0.0
  %2010 = vmatpush1.msra.mxu0 0.0
  %2011 = vmatprep.subr.mxu0 0.0
  %2012 = vmatpush1.msra.mxu0 0.0
  %2013 = vmatprep.subr.mxu0 0.0
  %2014 = vmatpush1.msra.mxu0 0.0
  %2015 = vmatprep.subr.mxu0 0.0
  %2016 = vmatpush1.msra.mxu0 0.0
  %2017 = vmatprep.subr.mxu0 0.0
  %2018 = vmatpush1.msra.mxu0 0.0
  %2019 = vmatprep.subr.mxu0 0.0
  %2020 = vmatpush1.msra.mxu0 %v1950
  %2021 = vmatprep.subr.mxu0 0.0
  %2022 = vmatpush1.msra.mxu0 %v1949
  %2023 = vmatprep.subr.mxu0 0.0
  %2024 = vmatpush1.msra.mxu0 %v1948
  %2025 = vmatprep.subr.mxu0 0.0
  %2026 = vmatpush1.msra.mxu0 %v1947
  %2027 = vmatprep.subr.mxu0 0.0
  %2028 = vmatpush1.msra.mxu0 %v1946
  %2029 = vmatprep.subr.mxu0 0.0
  %2030 = vmatpush1.msra.mxu0 %v1945
  %2031 = vmatprep.subr.mxu0 0.0
  %2032 = vmatpush1.msra.mxu0 %v1944
  %2033 = vmatprep.subr.mxu0 0.0
  %2034 = vmatpush1.msra.mxu0 %v1943
  %2035 = vmatprep.subr.mxu0 0.0
  %2036 = vmatpush1.msra.mxu0 %v1942
  %2037 = vmatprep.subr.mxu0 0.0
  %2038 = vmatpush2.msra.mxu0 0.0
  %2039 = vmatprep.subr.mxu0 0.0
  %2040 = vmatpush2.msra.mxu0 0.0
  %2041 = vmatprep.subr.mxu0 0.0
  %2042 = vmatpush2.msra.mxu0 0.0
  %2043 = vmatprep.subr.mxu0 0.0
  %2044 = vmatpush2.msra.mxu0 0.0
  %2045 = vmatprep.subr.mxu0 0.0
  %2046 = vmatpush2.msra.mxu0 0.0
  %2047 = vmatprep.subr.mxu0 0.0
  %2048 = vmatpush2.msra.mxu0 0.0
  %2049 = vmatprep.subr.mxu0 0.0
  %2050 = vmatpush2.msra.mxu0 0.0
  %2051 = vmatprep.subr.mxu0 0.0
  %2052 = vmatpush2.msra.mxu0 0.0
  %2053 = vmatprep.subr.mxu0 0.0
  %2054 = vmatpush2.msra.mxu0 0.0
  %2055 = vmatprep.subr.mxu0 0.0
  %2056 = vmatpush2.msra.mxu0 0.0
  %2057 = vmatprep.subr.mxu0 0.0
  %2058 = vmatpush2.msra.mxu0 0.0
  %2059 = vmatprep.subr.mxu0 0.0
  %2060 = vmatpush2.msra.mxu0 0.0
  %2061 = vmatprep.subr.mxu0 0.0
  %2062 = vmatpush2.msra.mxu0 0.0
  %2063 = vmatprep.subr.mxu0 0.0
  %2064 = vmatpush2.msra.mxu0 0.0
  %2065 = vmatprep.subr.mxu0 0.0
  %2066 = vmatpush2.msra.mxu0 0.0
  %2067 = vmatprep.subr.mxu0 0.0
  %2068 = vmatpush2.msra.mxu0 0.0
  %2069 = vmatprep.mubr.f32.mxu0 0.0
  %2070 = vmatmul.mubr.f32.gmra.mxu0 %v1958
  %v2071 = vpop.f32.mrf.mxu0
  %v2072 = vadd.f32 %v1955, %v2071
  %v2073 = vpop.f32.mrf.mxu0
  %2074 = vmatprep.mubr.f32.mxu0 0.0
  %2075 = vmatmul.mubr.f32.gmra.mxu0 %v1961
  %v2076 = vpop.f32.mrf.mxu0
  %v2077 = vadd.f32 %v1955, %v2076
  %v2078 = vpop.f32.mrf.mxu0
  %2079 = vmatprep.mubr.f32.mxu0 0.0
  %2080 = vmatmul.mubr.f32.gmra.mxu0 %v1964
  %v2081 = vpop.f32.mrf.mxu0
  %v2082 = vadd.f32 %v1955, %v2081
  %v2083 = vpop.f32.mrf.mxu0
  %2084 = vmatprep.mubr.f32.mxu0 0.0
  %2085 = vmatmul.mubr.f32.gmra.mxu0 %v1967
  %v2086 = vpop.f32.mrf.mxu0
  %v2087 = vadd.f32 %v1955, %v2086
  %v2088 = vpop.f32.mrf.mxu0
  %2089 = vmatprep.mubr.f32.mxu0 0.0
  %2090 = vmatmul.mubr.f32.gmra.mxu0 %v1970
  %v2091 = vpop.f32.mrf.mxu0
  %v2092 = vadd.f32 %v1955, %v2091
  %v2093 = vpop.f32.mrf.mxu0
  %2094 = vmatprep.mubr.f32.mxu0 0.0
  %2095 = vmatmul.mubr.f32.gmra.mxu0 %v1973
  %v2096 = vpop.f32.mrf.mxu0
  %v2097 = vadd.f32 %v1955, %v2096
  %v2098 = vpop.f32.mrf.mxu0
  %2099 = vmatprep.mubr.f32.mxu0 0.0
  %2100 = vmatmul.mubr.f32.gmra.mxu0 %v1976
  %v2101 = vpop.f32.mrf.mxu0
  %v2102 = vadd.f32 %v1955, %v2101
  %v2103 = vpop.f32.mrf.mxu0
  %2104 = vmatprep.mubr.f32.mxu0 0.0
  %2105 = vmatmul.mubr.f32.gmra.mxu0 %v1979
  %v2106 = vpop.f32.mrf.mxu0
  %v2107 = vadd.f32 %v1955, %v2106
  %v2108 = vpop.f32.mrf.mxu0
  %2109 = vmatprep.mubr.f32.mxu0 0.0
  %2110 = vmatmul.mubr.f32.gmra.mxu0 %v1982
  %v2111 = vpop.f32.mrf.mxu0
  %v2112 = vadd.f32 %v1955, %v2111
  %v2113 = vpop.f32.mrf.mxu0
  %2114 = vmatprep.mubr.f32.mxu0 0.0
  %2115 = vmatmul.mubr.f32.gmra.mxu0 %v1985
  %v2116 = vpop.f32.mrf.mxu0
  %v2117 = vadd.f32 %v1955, %v2116
  %v2118 = vpop.f32.mrf.mxu0
  %2119 = vmatprep.mubr.f32.mxu0 0.0
  %2120 = vmatmul.mubr.f32.gmra.mxu0 %v1988
  %v2121 = vpop.f32.mrf.mxu0
  %v2122 = vadd.f32 %v1955, %v2121
  %v2123 = vpop.f32.mrf.mxu0
  %2124 = vmatprep.mubr.f32.mxu0 0.0
  %2125 = vmatmul.mubr.f32.gmra.mxu0 %v1991
  %v2126 = vpop.f32.mrf.mxu0
  %v2127 = vadd.f32 %v1955, %v2126
  %v2128 = vpop.f32.mrf.mxu0
  %2129 = vmatprep.mubr.f32.mxu0 0.0
  %2130 = vmatmul.mubr.f32.gmra.mxu0 %v1994
  %v2131 = vpop.f32.mrf.mxu0
  %v2132 = vadd.f32 %v1955, %v2131
  %v2133 = vpop.f32.mrf.mxu0
  %2134 = vmatprep.mubr.f32.mxu0 0.0
  %2135 = vmatmul.mubr.f32.gmra.mxu0 %v1997
  %v2136 = vpop.f32.mrf.mxu0
  %v2137 = vadd.f32 %v1955, %v2136
  %v2138 = vpop.f32.mrf.mxu0
  %2139 = vmatprep.mubr.f32.mxu0 0.0
  %2140 = vmatmul.mubr.f32.gmra.mxu0 %v2000
  %v2141 = vpop.f32.mrf.mxu0
  %v2142 = vadd.f32 %v1955, %v2141
  %v2143 = vpop.f32.mrf.mxu0
  %2144 = vmatprep.mubr.f32.mxu0 0.0
  %2145 = vmatmul.mubr.f32.gmra.mxu0 %v2003
  %v2146 = vpop.f32.mrf.mxu0
  %v2147 = vadd.f32 %v1955, %v2146
  %v2148 = vpop.f32.mrf.mxu0
  %2149 = vdwg.mxu0
  %v2150 = vmax.f32 %v2072, 0.0
  %v2151 = vmax.f32 %v2077, 0.0
  %v2152 = vmax.f32 %v2082, 0.0
  %v2153 = vmax.f32 %v2087, 0.0
  %v2154 = vmax.f32 %v2092, 0.0
  %v2155 = vmax.f32 %v2097, 0.0
  %v2156 = vmax.f32 %v2102, 0.0
  %v2157 = vmax.f32 %v2107, 0.0
  %v2158 = vmax.f32 %v2112, 0.0
  %v2159 = vmax.f32 %v2117, 0.0
  %v2160 = vmax.f32 %v2122, 0.0
  %v2161 = vmax.f32 %v2127, 0.0
  %v2162 = vmax.f32 %v2132, 0.0
  %v2163 = vmax.f32 %v2137, 0.0
  %v2164 = vmax.f32 %v2142, 0.0
  %v2165 = vmax.f32 %v2147, 0.0
  %2182 = vrot.lane.b32.xlu0 %v1069, 120
  %v2183 = vpop.permute.xlu0 %2182
  %2184 = vrot.lane.b32.xlu0 %v1070, 120
  %v2185 = vpop.permute.xlu0 %2184
  %2186 = vrot.lane.b32.xlu0 %v1071, 120
  %v2187 = vpop.permute.xlu0 %2186
  %2188 = vrot.lane.b32.xlu0 %v1072, 120
  %v2189 = vpop.permute.xlu0 %2188
  %2190 = vrot.lane.b32.xlu0 %v1073, 120
  %v2191 = vpop.permute.xlu0 %2190
  %2192 = vrot.lane.b32.xlu0 %v1074, 120
  %v2193 = vpop.permute.xlu0 %2192
  %2194 = vrot.lane.b32.xlu0 %v1075, 120
  %v2195 = vpop.permute.xlu0 %2194
  %2196 = vrot.lane.b32.xlu0 %v1076, 120
  %v2197 = vpop.permute.xlu0 %2196
  %2198 = vrot.lane.b32.xlu0 %v1077, 120
  %v2199 = vpop.permute.xlu0 %2198
  %2200 = vrot.lane.b32.xlu0 %v1078, 120
  %v2201 = vpop.permute.xlu0 %2200
  %2202 = vrot.lane.b32.xlu0 %v1079, 120
  %v2203 = vpop.permute.xlu0 %2202
  %2204 = vrot.lane.b32.xlu0 %v1080, 120
  %v2205 = vpop.permute.xlu0 %2204
  %2206 = vrot.lane.b32.xlu0 %v1081, 120
  %v2207 = vpop.permute.xlu0 %2206
  %2208 = vrot.lane.b32.xlu0 %v1082, 120
  %v2209 = vpop.permute.xlu0 %2208
  %2210 = vrot.lane.b32.xlu0 %v1083, 120
  %v2211 = vpop.permute.xlu0 %2210
  %2212 = vrot.lane.b32.xlu0 %v1084, 120
  %v2213 = vpop.permute.xlu0 %2212
  %v2230 = vadd.f32 %v2150, %v2183
  %v2231 = vadd.f32 %v2151, %v2185
  %v2232 = vadd.f32 %v2152, %v2187
  %v2233 = vadd.f32 %v2153, %v2189
  %v2234 = vadd.f32 %v2154, %v2191
  %v2235 = vadd.f32 %v2155, %v2193
  %v2236 = vadd.f32 %v2156, %v2195
  %v2237 = vadd.f32 %v2157, %v2197
  %v2238 = vadd.f32 %v2158, %v2199
  %v2239 = vadd.f32 %v2159, %v2201
  %v2240 = vadd.f32 %v2160, %v2203
  %v2241 = vadd.f32 %v2161, %v2205
  %v2242 = vadd.f32 %v2162, %v2207
  %v2243 = vadd.f32 %v2163, %v2209
  %v2244 = vadd.f32 %v2164, %v2211
  %v2245 = vadd.f32 %v2165, %v2213
  %v2246 = vmax.f32 %v2230, 0.0
  %v2247 = vmax.f32 %v2231, 0.0
  %v2248 = vmax.f32 %v2232, 0.0
  %v2249 = vmax.f32 %v2233, 0.0
  %v2250 = vmax.f32 %v2234, 0.0
  %v2251 = vmax.f32 %v2235, 0.0
  %v2252 = vmax.f32 %v2236, 0.0
  %v2253 = vmax.f32 %v2237, 0.0
  %v2254 = vmax.f32 %v2238, 0.0
  %v2255 = vmax.f32 %v2239, 0.0
  %v2256 = vmax.f32 %v2240, 0.0
  %v2257 = vmax.f32 %v2241, 0.0
  %v2258 = vmax.f32 %v2242, 0.0
  %v2259 = vmax.f32 %v2243, 0.0
  %v2260 = vmax.f32 %v2244, 0.0
  %v2261 = vmax.f32 %v2245, 0.0
  %2262 = vst.msk [vmem:[%s7] sm:$0xff] %vm701, %v2246
  %2263 = vst.msk [vmem:[%s7 + $0x8] sm:$0xff] %vm701, %v2247
  %2264 = vst.msk [vmem:[%s7 + $0x10] sm:$0xff] %vm701, %v2248
  %2265 = vst.msk [vmem:[%s7 + $0x18] sm:$0xff] %vm701, %v2249
  %2266 = vst.msk [vmem:[%s7 + $0x20] sm:$0xff] %vm701, %v2250
  %2267 = vst.msk [vmem:[%s7 + $0x28] sm:$0xff] %vm701, %v2251
  %2268 = vst.msk [vmem:[%s7 + $0x30] sm:$0xff] %vm701, %v2252
  %2269 = vst.msk [vmem:[%s7 + $0x38] sm:$0xff] %vm701, %v2253
  %2270 = vst.msk [vmem:[%s7 + $0x40] sm:$0xff] %vm701, %v2254
  %2271 = vst.msk [vmem:[%s7 + $0x48] sm:$0xff] %vm701, %v2255
  %2272 = vst.msk [vmem:[%s7 + $0x50] sm:$0xff] %vm701, %v2256
  %2273 = vst.msk [vmem:[%s7 + $0x58] sm:$0xff] %vm701, %v2257
  %2274 = vst.msk [vmem:[%s7 + $0x60] sm:$0xff] %vm701, %v2258
  %2275 = vst.msk [vmem:[%s7 + $0x68] sm:$0xff] %vm701, %v2259
  %2276 = vst.msk [vmem:[%s7 + $0x70] sm:$0xff] %vm701, %v2260
  %2277 = vst.msk [vmem:[%s7 + $0x78] sm:$0xff] %vm701, %v2261
  // Predicated region
  $region30: #{tpu_custom_call.1} parent=0 // pred_check
    _
  $region31: #{tpu_custom_call.1} parent=0 // pred_check_branch
    %2279 = sbr.rel (0) target = $region33
  $region32: #{tpu_custom_call.1} parent=0 // pred_region
    _
  $region33: #{tpu_custom_call.1} parent=0 // pred_fallthru
    _
  // Predicated region
  $region34: #{tpu_custom_call.1} parent=0 // pred_check
    _
  $region35: #{tpu_custom_call.1} parent=0 // pred_check_branch
    %2281 = sbr.rel (0) target = $region37
  $region36: #{tpu_custom_call.1} parent=0 // pred_region
    _
  $region37: #{tpu_custom_call.1} parent=0 // pred_fallthru
    _

</llo_original>
